<compile_context>
chip_gen: v5e
topology: v5e:2x2
jax: 0.10.0
libtpu: 0.0.40
codegen_flags: <defaults>
</compile_context>

<pallas_src>
import functools

import jax
import jax.numpy as jnp
from jax import lax
from jax.experimental import pallas as pl
from jax.experimental.pallas import tpu as pltpu


def _channel_attention_kernel(x_ref, wqkv_ref, bqkv_ref, wproj_ref, bproj_ref,
                              o_ref, qkv_scr, out_scr, *, num_heads):
    TL = x_ref.shape[1]          # sequence tile (sits on the 128-lane axis below)
    C = x_ref.shape[2]
    D = C // num_heads
    mxu_dtype = wqkv_ref.dtype   # f32 (exact) or bf16 (fast MXU path)

    x = x_ref[0].astype(mxu_dtype)                                    # (TL, C)

    # ---- QKV projection (MXU), emitted directly in transposed (3C, TL) layout.
    # Weight is passed as (3C, C) so this is a native "NT" matmul (contract the
    # last dim of both operands) -- no XLU transpose of a (TL, 3C) result.
    qkv_t = lax.dot_general(
        wqkv_ref[...], x,
        dimension_numbers=(((1,), (1,)), ((), ())),
        preferred_element_type=jnp.float32)                           # (3C, TL)
    # Stage in VMEM scratch: the per-head slices below are cheap ref reads and
    # the full (3C, TL) value goes dead immediately (no vreg spills).
    qkv_scr[...] = qkv_t + bqkv_ref[...]      # bias (3C, 1): lane-splat broadcast

    # scale = self.dim ** -0.5 (full C, NOT head_dim) -- matches the PyTorch
    # module by design; do not "fix".
    scale = jnp.float32(C) ** jnp.float32(-0.5)

    def head_body(h, carry):
        off_q = pl.multiple_of(h * D, D)
        off_k = pl.multiple_of(C + h * D, D)
        off_v = pl.multiple_of(2 * C + h * D, D)
        q_h = qkv_scr[pl.ds(off_q, D), :] * scale                     # (D, TL)
        k_h = qkv_scr[pl.ds(off_k, D), :]                             # (D, TL)
        v_h = qkv_scr[pl.ds(off_v, D), :]                             # (D, TL)

        # scores[j, i, l] = scale*q[l, i] * k[l, j]; the softmax axis j is the
        # OUTER axis, so max / sum / p*v reductions are plain cross-vreg VPU
        # ops and every exp vreg is lane-dense (TL on the lane axis).
        s = k_h[:, None, :] * q_h[None, :, :]                         # (Dj, Di, TL)
        m = jnp.max(s, axis=0)                                        # (Di, TL)
        p = jnp.exp(s - m[None, :, :])                                # (Dj, Di, TL)
        denom = jnp.sum(p, axis=0)                                    # (Di, TL)
        # Fused normalization: reduce p*v first, one reciprocal per output
        # element (EUP slot) + one Newton step (2 VPU ops) -> near-f32 accuracy.
        num = jnp.sum(p * v_h[:, None, :], axis=0)                    # (Di, TL)
        r = pl.reciprocal(denom, approx=True)
        r = r * (2.0 - denom * r)
        out_scr[pl.ds(off_q, D), :] = num * r                         # (D, TL)
        return carry

    # unroll=True keeps full LLO scheduling visibility; each head's
    # intermediates die at its out_scr store so vreg pressure stays bounded.
    lax.fori_loop(0, num_heads, head_body, 0, unroll=True)

    # ---- Output projection (MXU): "TN" dot_general consumes the staged
    # (C, TL) per-head result directly and emits (TL, C) -- no transpose.
    out = lax.dot_general(
        out_scr[...].astype(mxu_dtype), wproj_ref[...],
        dimension_numbers=(((0,), (0,)), ((), ())),
        preferred_element_type=jnp.float32) + bproj_ref[...]          # (TL, C)

    # Note: C = 64 < 128 lanes, so this store is inherently a masked vst; a
    # property of the model width, not something to fix in-kernel.
    o_ref[0] = out.astype(o_ref.dtype)


def _pick_tile_l(L, B, min_steps=2):
    # Tile choice is bounded by vreg pressure and grid occupancy, NOT VMEM
    # (total VMEM here -- x/out tiles, weights, two scratch slabs -- is < 1 MiB
    # on every generation).  Prefer a lane-dense tile (multiple of 128) that
    # still leaves >= min_steps "parallel" grid steps so v7x's two TensorCores
    # both get work and the BlockSpec pipeline has something to prefetch; 128
    # keeps one head's (D, D, TL) softmax intermediates at ~8 vregs.
    for cand in (128, 256):
        if L % cand == 0 and B * (L // cand) >= min_steps:
            return cand
    for cand in (256, 128, 64, 32, 16, 8):
        if L % cand == 0:
            return cand
    return L


def channel_attention(x, wqkv, bqkv, wproj, bproj, *, num_heads, tile_l=None,
                      mxu_dtype=None):
    """Channel attention forward.

    x:     (B, L, C) float32 (NLC, as in the PyTorch module)
    wqkv:  (C, 3C)  -- (in, out) layout, i.e. PyTorch qkv_linear.weight.T
    bqkv:  (3C,)
    wproj: (C, C)   -- (in, out) layout, i.e. PyTorch proj.weight.T
    bproj: (C,)
    mxu_dtype: None / jnp.float32 for f32 matmuls, jnp.bfloat16 to feed the MXU
      bf16 operands (f32 accumulation).  Softmax math is always f32.
    """
    B, L, C = x.shape
    assert C % num_heads == 0, "dim must be divisible by num_heads!"
    D = C // num_heads
    if tile_l is None:
        tile_l = _pick_tile_l(L, B)
    assert L % tile_l == 0

    w_dtype = jnp.float32 if mxu_dtype is None else mxu_dtype
    # Host-side (once per call, tiny arrays) weight layouts for the in-kernel
    # matmul forms: QKV weight as (3C, C) for the NT matmul that emits the
    # transposed (3C, TL) QKV; proj weight stays (C_in, C_out) for the TN form.
    wqkv_nt = wqkv.T.astype(w_dtype)                     # (3C, C)
    wproj_tn = wproj.astype(w_dtype)                     # (C, C)
    bqkv_col = bqkv.reshape(3 * C, 1).astype(jnp.float32)
    bproj_row = bproj.reshape(1, C).astype(jnp.float32)

    kernel = functools.partial(_channel_attention_kernel, num_heads=num_heads)

    # Advisory cost: this kernel is transcendental/VPU heavy, not matmul heavy.
    flops = 8 * B * L * C * C + 6 * B * L * C * D
    transcendentals = B * L * C * D + B * L * C
    bytes_accessed = 4 * (2 * B * L * C + 4 * C * C + 4 * C)

    return pl.pallas_call(
        kernel,
        out_shape=jax.ShapeDtypeStruct((B, L, C), x.dtype),
        grid=(B, L // tile_l),
        in_specs=[
            pl.BlockSpec((1, tile_l, C), lambda b, l: (b, l, 0)),   # x tile
            pl.BlockSpec((3 * C, C), lambda b, l: (0, 0)),          # Wqkv (3C, C), resident
            pl.BlockSpec((3 * C, 1), lambda b, l: (0, 0)),          # bqkv (3C, 1)
            pl.BlockSpec((C, C), lambda b, l: (0, 0)),              # Wproj (C_in, C_out)
            pl.BlockSpec((1, C), lambda b, l: (0, 0)),              # bproj
        ],
        out_specs=pl.BlockSpec((1, tile_l, C), lambda b, l: (b, l, 0)),
        scratch_shapes=[
            pltpu.VMEM((3 * C, tile_l), jnp.float32),               # staged QKV^T
            pltpu.VMEM((C, tile_l), jnp.float32),                   # staged per-head out
        ],
        compiler_params=pltpu.CompilerParams(
            dimension_semantics=("parallel", "parallel")),
        cost_estimate=pl.CostEstimate(
            flops=flops,
            transcendentals=transcendentals,
            bytes_accessed=bytes_accessed),
    )(x, wqkv_nt, bqkv_col, wproj_tn, bproj_row)


def channel_attention_ref(x, wqkv, bqkv, wproj, bproj, *, num_heads):
    """Pure-JAX reference mirroring the PyTorch forward exactly."""
    B, L, C = x.shape
    D = C // num_heads
    scale = C ** (-0.5)
    qkv = x @ wqkv + bqkv                                    # (B, L, 3C)
    q, k, v = jnp.split(qkv, 3, axis=-1)
    q = q.reshape(B, L, num_heads, D).transpose(0, 2, 1, 3)  # (B, H, L, D)
    k = k.reshape(B, L, num_heads, D).transpose(0, 2, 1, 3)
    v = v.reshape(B, L, num_heads, D).transpose(0, 2, 1, 3)
    attn = (q * scale)[..., :, None] * k[..., None, :]       # (B, H, L, D, D)
    attn = jax.nn.softmax(attn, axis=-1)
    out = jnp.einsum('bhlij,bhlj->bhli', attn, v)            # (B, H, L, D)
    out = out.transpose(0, 2, 1, 3).reshape(B, L, C)
    return out @ wproj + bproj


if __name__ == "__main__":
    B, L, C = 2, 256, 64
    num_heads = 8            # head_dim = 8

    key = jax.random.PRNGKey(0)
    kx, kw1, kb1, kw2, kb2 = jax.random.split(key, 5)

    x = jax.random.normal(kx, (B, L, C), dtype=jnp.float32)
    # Deterministic synthetic parameters (shapes from nn.Linear in __init__).
    wqkv = jax.random.normal(kw1, (C, 3 * C), dtype=jnp.float32) * 0.1
    bqkv = jax.random.normal(kb1, (3 * C,), dtype=jnp.float32) * 0.1
    wproj = jax.random.normal(kw2, (C, C), dtype=jnp.float32) * 0.1
    bproj = jax.random.normal(kb2, (C,), dtype=jnp.float32) * 0.1

    ref = channel_attention_ref(x, wqkv, bqkv, wproj, bproj, num_heads=num_heads)

    # ---- f32 MXU path (default) ------------------------------------------
    out = channel_attention(x, wqkv, bqkv, wproj, bproj, num_heads=num_heads)
    out = jax.block_until_ready(out)
    assert out.shape == (B, L, C)
    max_err = float(jnp.max(jnp.abs(out - ref)))
    # Tolerance covers the TPU default-precision matmul passes on both sides;
    # the softmax path (NR-refined reciprocal) is near-exact.
    assert jnp.allclose(out, ref, rtol=5e-3, atol=5e-3), \
        f"f32 path mismatch vs reference (max abs err {max_err})"

    # ---- bf16 MXU-operand path (fast on v5e/v6e/v7x) -----------------------
    out_bf16 = channel_attention(x, wqkv, bqkv, wproj, bproj,
                                 num_heads=num_heads, mxu_dtype=jnp.bfloat16)
    out_bf16 = jax.block_until_ready(out_bf16)
    max_err_bf16 = float(jnp.max(jnp.abs(out_bf16 - ref)))
    assert jnp.allclose(out_bf16, ref, rtol=5e-2, atol=5e-2), \
        f"bf16 path mismatch vs reference (max abs err {max_err_bf16})"

    print("KERNEL_OK")
</pallas_src>

<mosaic_0001>
module attributes {stable_mosaic.version = 11 : i64} {
  func.func @_channel_attention_kernel(%arg0: i32, %arg1: i32, %arg2: memref<1x128x64xf32, #tpu.memory_space<vmem>>, %arg3: memref<192x64xf32, #tpu.memory_space<vmem>>, %arg4: memref<192x1xf32, #tpu.memory_space<vmem>>, %arg5: memref<64x64xf32, #tpu.memory_space<vmem>>, %arg6: memref<1x64xf32, #tpu.memory_space<vmem>>, %arg7: memref<1x128x64xf32, #tpu.memory_space<vmem>>, %arg8: memref<192x128xf32, #tpu.memory_space<vmem>>, %arg9: memref<64x128xf32, #tpu.memory_space<vmem>>) attributes {dimension_semantics = [#tpu.dimension_semantics<parallel>, #tpu.dimension_semantics<parallel>], iteration_bounds = array<i64: 2, 2>, scalar_prefetch = 0 : i64, scratch_operands = 2 : i64, tpu.core_type = #tpu.core_type<tc>, window_params = [{transform_indices = @transform_0, window_bounds = array<i64: 1, 128, 64>}, {pipeline_mode = #tpu.pipeline_mode<synchronous>, transform_indices = @transform_1, window_bounds = array<i64: 192, 64>}, {pipeline_mode = #tpu.pipeline_mode<synchronous>, transform_indices = @transform_2, window_bounds = array<i64: 192, 1>}, {pipeline_mode = #tpu.pipeline_mode<synchronous>, transform_indices = @transform_3, window_bounds = array<i64: 64, 64>}, {pipeline_mode = #tpu.pipeline_mode<synchronous>, transform_indices = @transform_4, window_bounds = array<i64: 1, 64>}, {transform_indices = @transform_5, window_bounds = array<i64: 1, 128, 64>}]} {
    %c0 = arith.constant 0 : index
    %c0_0 = arith.constant 0 : index
    %c0_1 = arith.constant 0 : index
    %0 = vector.load %arg2[%c0, %c0_0, %c0_1] : memref<1x128x64xf32, #tpu.memory_space<vmem>>, vector<1x128x64xf32>
    %1 = vector.shape_cast %0 : vector<1x128x64xf32> to vector<128x64xf32>
    %c0_2 = arith.constant 0 : index
    %c0_3 = arith.constant 0 : index
    %2 = vector.load %arg3[%c0_2, %c0_3] : memref<192x64xf32, #tpu.memory_space<vmem>>, vector<192x64xf32>
    %cst = arith.constant dense<0.000000e+00> : vector<192x128xf32>
    %3 = tpu.matmul %2, %1, %cst {dimension_numbers = #tpu.dot_dimension_numbers<[1], [1], [0], [0], [0, 0, 1, 0], [], []>} : vector<192x64xf32>, vector<128x64xf32>, vector<192x128xf32> -> vector<192x128xf32>
    %c0_4 = arith.constant 0 : index
    %c0_5 = arith.constant 0 : index
    %4 = vector.load %arg4[%c0_4, %c0_5] : memref<192x1xf32, #tpu.memory_space<vmem>>, vector<192x1xf32>
    %5 = vector.broadcast %4 : vector<192x1xf32> to vector<192x128xf32>
    %6 = arith.addf %3, %5 : vector<192x128xf32>
    %c0_6 = arith.constant 0 : index
    %c0_7 = arith.constant 0 : index
    %7 = vector.load %arg8[%c0_6, %c0_7] : memref<192x128xf32, #tpu.memory_space<vmem>>, vector<192x128xf32>
    tpu.vector_store %arg8[%c0_6, %c0_7], %6 {strides = array<i32>} : memref<192x128xf32, #tpu.memory_space<vmem>>, vector<192x128xf32>,
    %cst_8 = arith.constant 6.400000e+01 : f32
    %cst_9 = arith.constant -5.000000e-01 : f32
    %8 = math.powf %cst_8, %cst_9 : f32
    %c0_i32 = arith.constant 0 : i32
    %c8_i32 = arith.constant 8 : i32
    %9 = arith.muli %c0_i32, %c8_i32 : i32
    %10 = tpu.assume_multiple %9, 8 : i32
    %c8_i32_10 = arith.constant 8 : i32
    %11 = arith.muli %c0_i32, %c8_i32_10 : i32
    %c64_i32 = arith.constant 64 : i32
    %12 = arith.addi %c64_i32, %11 : i32
    %13 = tpu.assume_multiple %12, 8 : i32
    %c8_i32_11 = arith.constant 8 : i32
    %14 = arith.muli %c0_i32, %c8_i32_11 : i32
    %c128_i32 = arith.constant 128 : i32
    %15 = arith.addi %c128_i32, %14 : i32
    %16 = tpu.assume_multiple %15, 8 : i32
    %17 = arith.index_cast %10 : i32 to index
    %c0_12 = arith.constant 0 : index
    %18 = vector.load %arg8[%17, %c0_12] : memref<192x128xf32, #tpu.memory_space<vmem>>, vector<8x128xf32>
    %19 = vector.broadcast %8 : f32 to vector<8x128xf32>
    %20 = arith.mulf %18, %19 : vector<8x128xf32>
    %21 = arith.index_cast %13 : i32 to index
    %c0_13 = arith.constant 0 : index
    %22 = vector.load %arg8[%21, %c0_13] : memref<192x128xf32, #tpu.memory_space<vmem>>, vector<8x128xf32>
    %23 = arith.index_cast %16 : i32 to index
    %c0_14 = arith.constant 0 : index
    %24 = vector.load %arg8[%23, %c0_14] : memref<192x128xf32, #tpu.memory_space<vmem>>, vector<8x128xf32>
    %25 = vector.shape_cast %22 : vector<8x128xf32> to vector<8x1x128xf32>
    %26 = vector.shape_cast %20 : vector<8x128xf32> to vector<1x8x128xf32>
    %27 = vector.broadcast %25 : vector<8x1x128xf32> to vector<8x8x128xf32>
    %28 = vector.broadcast %26 : vector<1x8x128xf32> to vector<8x8x128xf32>
    %29 = arith.mulf %27, %28 : vector<8x8x128xf32>
    %cst_15 = arith.constant dense<0xFF800000> : vector<8x128xf32>
    %30 = vector.multi_reduction <maximumf>, %29, %cst_15 [0] : vector<8x8x128xf32> to vector<8x128xf32>
    %31 = vector.shape_cast %30 : vector<8x128xf32> to vector<1x8x128xf32>
    %32 = vector.broadcast %31 : vector<1x8x128xf32> to vector<8x8x128xf32>
    %33 = arith.subf %29, %32 : vector<8x8x128xf32>
    %34 = math.exp %33 : vector<8x8x128xf32>
    %cst_16 = arith.constant dense<0.000000e+00> : vector<8x128xf32>
    %35 = vector.multi_reduction <add>, %34, %cst_16 [0] : vector<8x8x128xf32> to vector<8x128xf32>
    %36 = vector.shape_cast %24 : vector<8x128xf32> to vector<8x1x128xf32>
    %37 = vector.broadcast %36 : vector<8x1x128xf32> to vector<8x8x128xf32>
    %38 = arith.mulf %34, %37 : vector<8x8x128xf32>
    %cst_17 = arith.constant dense<0.000000e+00> : vector<8x128xf32>
    %39 = vector.multi_reduction <add>, %38, %cst_17 [0] : vector<8x8x128xf32> to vector<8x128xf32>
    %40 = tpu.reciprocal %35 {approx = true} : vector<8x128xf32> -> vector<8x128xf32>
    %41 = arith.mulf %35, %40 : vector<8x128xf32>
    %cst_18 = arith.constant 2.000000e+00 : f32
    %42 = vector.broadcast %cst_18 : f32 to vector<8x128xf32>
    %43 = arith.subf %42, %41 : vector<8x128xf32>
    %44 = arith.mulf %40, %43 : vector<8x128xf32>
    %45 = arith.mulf %39, %44 : vector<8x128xf32>
    %46 = arith.index_cast %10 : i32 to index
    %c0_19 = arith.constant 0 : index
    %47 = vector.load %arg9[%46, %c0_19] : memref<64x128xf32, #tpu.memory_space<vmem>>, vector<8x128xf32>
    tpu.vector_store %arg9[%46, %c0_19], %45 {strides = array<i32>} : memref<64x128xf32, #tpu.memory_space<vmem>>, vector<8x128xf32>,
    %c1_i32 = arith.constant 1 : i32
    %c8_i32_20 = arith.constant 8 : i32
    %48 = arith.muli %c1_i32, %c8_i32_20 : i32
    %49 = tpu.assume_multiple %48, 8 : i32
    %c8_i32_21 = arith.constant 8 : i32
    %50 = arith.muli %c1_i32, %c8_i32_21 : i32
    %c64_i32_22 = arith.constant 64 : i32
    %51 = arith.addi %c64_i32_22, %50 : i32
    %52 = tpu.assume_multiple %51, 8 : i32
    %c8_i32_23 = arith.constant 8 : i32
    %53 = arith.muli %c1_i32, %c8_i32_23 : i32
    %c128_i32_24 = arith.constant 128 : i32
    %54 = arith.addi %c128_i32_24, %53 : i32
    %55 = tpu.assume_multiple %54, 8 : i32
    %56 = arith.index_cast %49 : i32 to index
    %c0_25 = arith.constant 0 : index
    %57 = vector.load %arg8[%56, %c0_25] : memref<192x128xf32, #tpu.memory_space<vmem>>, vector<8x128xf32>
    %58 = vector.broadcast %8 : f32 to vector<8x128xf32>
    %59 = arith.mulf %57, %58 : vector<8x128xf32>
    %60 = arith.index_cast %52 : i32 to index
    %c0_26 = arith.constant 0 : index
    %61 = vector.load %arg8[%60, %c0_26] : memref<192x128xf32, #tpu.memory_space<vmem>>, vector<8x128xf32>
    %62 = arith.index_cast %55 : i32 to index
    %c0_27 = arith.constant 0 : index
    %63 = vector.load %arg8[%62, %c0_27] : memref<192x128xf32, #tpu.memory_space<vmem>>, vector<8x128xf32>
    %64 = vector.shape_cast %61 : vector<8x128xf32> to vector<8x1x128xf32>
    %65 = vector.shape_cast %59 : vector<8x128xf32> to vector<1x8x128xf32>
    %66 = vector.broadcast %64 : vector<8x1x128xf32> to vector<8x8x128xf32>
    %67 = vector.broadcast %65 : vector<1x8x128xf32> to vector<8x8x128xf32>
    %68 = arith.mulf %66, %67 : vector<8x8x128xf32>
    %cst_28 = arith.constant dense<0xFF800000> : vector<8x128xf32>
    %69 = vector.multi_reduction <maximumf>, %68, %cst_28 [0] : vector<8x8x128xf32> to vector<8x128xf32>
    %70 = vector.shape_cast %69 : vector<8x128xf32> to vector<1x8x128xf32>
    %71 = vector.broadcast %70 : vector<1x8x128xf32> to vector<8x8x128xf32>
    %72 = arith.subf %68, %71 : vector<8x8x128xf32>
    %73 = math.exp %72 : vector<8x8x128xf32>
    %cst_29 = arith.constant dense<0.000000e+00> : vector<8x128xf32>
    %74 = vector.multi_reduction <add>, %73, %cst_29 [0] : vector<8x8x128xf32> to vector<8x128xf32>
    %75 = vector.shape_cast %63 : vector<8x128xf32> to vector<8x1x128xf32>
    %76 = vector.broadcast %75 : vector<8x1x128xf32> to vector<8x8x128xf32>
    %77 = arith.mulf %73, %76 : vector<8x8x128xf32>
    %cst_30 = arith.constant dense<0.000000e+00> : vector<8x128xf32>
    %78 = vector.multi_reduction <add>, %77, %cst_30 [0] : vector<8x8x128xf32> to vector<8x128xf32>
    %79 = tpu.reciprocal %74 {approx = true} : vector<8x128xf32> -> vector<8x128xf32>
    %80 = arith.mulf %74, %79 : vector<8x128xf32>
    %cst_31 = arith.constant 2.000000e+00 : f32
    %81 = vector.broadcast %cst_31 : f32 to vector<8x128xf32>
    %82 = arith.subf %81, %80 : vector<8x128xf32>
    %83 = arith.mulf %79, %82 : vector<8x128xf32>
    %84 = arith.mulf %78, %83 : vector<8x128xf32>
    %85 = arith.index_cast %49 : i32 to index
    %c0_32 = arith.constant 0 : index
    %86 = vector.load %arg9[%85, %c0_32] : memref<64x128xf32, #tpu.memory_space<vmem>>, vector<8x128xf32>
    tpu.vector_store %arg9[%85, %c0_32], %84 {strides = array<i32>} : memref<64x128xf32, #tpu.memory_space<vmem>>, vector<8x128xf32>,
    %c2_i32 = arith.constant 2 : i32
    %c8_i32_33 = arith.constant 8 : i32
    %87 = arith.muli %c2_i32, %c8_i32_33 : i32
    %88 = tpu.assume_multiple %87, 8 : i32
    %c8_i32_34 = arith.constant 8 : i32
    %89 = arith.muli %c2_i32, %c8_i32_34 : i32
    %c64_i32_35 = arith.constant 64 : i32
    %90 = arith.addi %c64_i32_35, %89 : i32
    %91 = tpu.assume_multiple %90, 8 : i32
    %c8_i32_36 = arith.constant 8 : i32
    %92 = arith.muli %c2_i32, %c8_i32_36 : i32
    %c128_i32_37 = arith.constant 128 : i32
    %93 = arith.addi %c128_i32_37, %92 : i32
    %94 = tpu.assume_multiple %93, 8 : i32
    %95 = arith.index_cast %88 : i32 to index
    %c0_38 = arith.constant 0 : index
    %96 = vector.load %arg8[%95, %c0_38] : memref<192x128xf32, #tpu.memory_space<vmem>>, vector<8x128xf32>
    %97 = vector.broadcast %8 : f32 to vector<8x128xf32>
    %98 = arith.mulf %96, %97 : vector<8x128xf32>
    %99 = arith.index_cast %91 : i32 to index
    %c0_39 = arith.constant 0 : index
    %100 = vector.load %arg8[%99, %c0_39] : memref<192x128xf32, #tpu.memory_space<vmem>>, vector<8x128xf32>
    %101 = arith.index_cast %94 : i32 to index
    %c0_40 = arith.constant 0 : index
    %102 = vector.load %arg8[%101, %c0_40] : memref<192x128xf32, #tpu.memory_space<vmem>>, vector<8x128xf32>
    %103 = vector.shape_cast %100 : vector<8x128xf32> to vector<8x1x128xf32>
    %104 = vector.shape_cast %98 : vector<8x128xf32> to vector<1x8x128xf32>
    %105 = vector.broadcast %103 : vector<8x1x128xf32> to vector<8x8x128xf32>
    %106 = vector.broadcast %104 : vector<1x8x128xf32> to vector<8x8x128xf32>
    %107 = arith.mulf %105, %106 : vector<8x8x128xf32>
    %cst_41 = arith.constant dense<0xFF800000> : vector<8x128xf32>
    %108 = vector.multi_reduction <maximumf>, %107, %cst_41 [0] : vector<8x8x128xf32> to vector<8x128xf32>
    %109 = vector.shape_cast %108 : vector<8x128xf32> to vector<1x8x128xf32>
    %110 = vector.broadcast %109 : vector<1x8x128xf32> to vector<8x8x128xf32>
    %111 = arith.subf %107, %110 : vector<8x8x128xf32>
    %112 = math.exp %111 : vector<8x8x128xf32>
    %cst_42 = arith.constant dense<0.000000e+00> : vector<8x128xf32>
    %113 = vector.multi_reduction <add>, %112, %cst_42 [0] : vector<8x8x128xf32> to vector<8x128xf32>
    %114 = vector.shape_cast %102 : vector<8x128xf32> to vector<8x1x128xf32>
    %115 = vector.broadcast %114 : vector<8x1x128xf32> to vector<8x8x128xf32>
    %116 = arith.mulf %112, %115 : vector<8x8x128xf32>
    %cst_43 = arith.constant dense<0.000000e+00> : vector<8x128xf32>
    %117 = vector.multi_reduction <add>, %116, %cst_43 [0] : vector<8x8x128xf32> to vector<8x128xf32>
    %118 = tpu.reciprocal %113 {approx = true} : vector<8x128xf32> -> vector<8x128xf32>
    %119 = arith.mulf %113, %118 : vector<8x128xf32>
    %cst_44 = arith.constant 2.000000e+00 : f32
    %120 = vector.broadcast %cst_44 : f32 to vector<8x128xf32>
    %121 = arith.subf %120, %119 : vector<8x128xf32>
    %122 = arith.mulf %118, %121 : vector<8x128xf32>
    %123 = arith.mulf %117, %122 : vector<8x128xf32>
    %124 = arith.index_cast %88 : i32 to index
    %c0_45 = arith.constant 0 : index
    %125 = vector.load %arg9[%124, %c0_45] : memref<64x128xf32, #tpu.memory_space<vmem>>, vector<8x128xf32>
    tpu.vector_store %arg9[%124, %c0_45], %123 {strides = array<i32>} : memref<64x128xf32, #tpu.memory_space<vmem>>, vector<8x128xf32>,
    %c3_i32 = arith.constant 3 : i32
    %c8_i32_46 = arith.constant 8 : i32
    %126 = arith.muli %c3_i32, %c8_i32_46 : i32
    %127 = tpu.assume_multiple %126, 8 : i32
    %c8_i32_47 = arith.constant 8 : i32
    %128 = arith.muli %c3_i32, %c8_i32_47 : i32
    %c64_i32_48 = arith.constant 64 : i32
    %129 = arith.addi %c64_i32_48, %128 : i32
    %130 = tpu.assume_multiple %129, 8 : i32
    %c8_i32_49 = arith.constant 8 : i32
    %131 = arith.muli %c3_i32, %c8_i32_49 : i32
    %c128_i32_50 = arith.constant 128 : i32
    %132 = arith.addi %c128_i32_50, %131 : i32
    %133 = tpu.assume_multiple %132, 8 : i32
    %134 = arith.index_cast %127 : i32 to index
    %c0_51 = arith.constant 0 : index
    %135 = vector.load %arg8[%134, %c0_51] : memref<192x128xf32, #tpu.memory_space<vmem>>, vector<8x128xf32>
    %136 = vector.broadcast %8 : f32 to vector<8x128xf32>
    %137 = arith.mulf %135, %136 : vector<8x128xf32>
    %138 = arith.index_cast %130 : i32 to index
    %c0_52 = arith.constant 0 : index
    %139 = vector.load %arg8[%138, %c0_52] : memref<192x128xf32, #tpu.memory_space<vmem>>, vector<8x128xf32>
    %140 = arith.index_cast %133 : i32 to index
    %c0_53 = arith.constant 0 : index
    %141 = vector.load %arg8[%140, %c0_53] : memref<192x128xf32, #tpu.memory_space<vmem>>, vector<8x128xf32>
    %142 = vector.shape_cast %139 : vector<8x128xf32> to vector<8x1x128xf32>
    %143 = vector.shape_cast %137 : vector<8x128xf32> to vector<1x8x128xf32>
    %144 = vector.broadcast %142 : vector<8x1x128xf32> to vector<8x8x128xf32>
    %145 = vector.broadcast %143 : vector<1x8x128xf32> to vector<8x8x128xf32>
    %146 = arith.mulf %144, %145 : vector<8x8x128xf32>
    %cst_54 = arith.constant dense<0xFF800000> : vector<8x128xf32>
    %147 = vector.multi_reduction <maximumf>, %146, %cst_54 [0] : vector<8x8x128xf32> to vector<8x128xf32>
    %148 = vector.shape_cast %147 : vector<8x128xf32> to vector<1x8x128xf32>
    %149 = vector.broadcast %148 : vector<1x8x128xf32> to vector<8x8x128xf32>
    %150 = arith.subf %146, %149 : vector<8x8x128xf32>
    %151 = math.exp %150 : vector<8x8x128xf32>
    %cst_55 = arith.constant dense<0.000000e+00> : vector<8x128xf32>
    %152 = vector.multi_reduction <add>, %151, %cst_55 [0] : vector<8x8x128xf32> to vector<8x128xf32>
    %153 = vector.shape_cast %141 : vector<8x128xf32> to vector<8x1x128xf32>
    %154 = vector.broadcast %153 : vector<8x1x128xf32> to vector<8x8x128xf32>
    %155 = arith.mulf %151, %154 : vector<8x8x128xf32>
    %cst_56 = arith.constant dense<0.000000e+00> : vector<8x128xf32>
    %156 = vector.multi_reduction <add>, %155, %cst_56 [0] : vector<8x8x128xf32> to vector<8x128xf32>
    %157 = tpu.reciprocal %152 {approx = true} : vector<8x128xf32> -> vector<8x128xf32>
    %158 = arith.mulf %152, %157 : vector<8x128xf32>
    %cst_57 = arith.constant 2.000000e+00 : f32
    %159 = vector.broadcast %cst_57 : f32 to vector<8x128xf32>
    %160 = arith.subf %159, %158 : vector<8x128xf32>
    %161 = arith.mulf %157, %160 : vector<8x128xf32>
    %162 = arith.mulf %156, %161 : vector<8x128xf32>
    %163 = arith.index_cast %127 : i32 to index
    %c0_58 = arith.constant 0 : index
    %164 = vector.load %arg9[%163, %c0_58] : memref<64x128xf32, #tpu.memory_space<vmem>>, vector<8x128xf32>
    tpu.vector_store %arg9[%163, %c0_58], %162 {strides = array<i32>} : memref<64x128xf32, #tpu.memory_space<vmem>>, vector<8x128xf32>,
    %c4_i32 = arith.constant 4 : i32
    %c8_i32_59 = arith.constant 8 : i32
    %165 = arith.muli %c4_i32, %c8_i32_59 : i32
    %166 = tpu.assume_multiple %165, 8 : i32
    %c8_i32_60 = arith.constant 8 : i32
    %167 = arith.muli %c4_i32, %c8_i32_60 : i32
    %c64_i32_61 = arith.constant 64 : i32
    %168 = arith.addi %c64_i32_61, %167 : i32
    %169 = tpu.assume_multiple %168, 8 : i32
    %c8_i32_62 = arith.constant 8 : i32
    %170 = arith.muli %c4_i32, %c8_i32_62 : i32
    %c128_i32_63 = arith.constant 128 : i32
    %171 = arith.addi %c128_i32_63, %170 : i32
    %172 = tpu.assume_multiple %171, 8 : i32
    %173 = arith.index_cast %166 : i32 to index
    %c0_64 = arith.constant 0 : index
    %174 = vector.load %arg8[%173, %c0_64] : memref<192x128xf32, #tpu.memory_space<vmem>>, vector<8x128xf32>
    %175 = vector.broadcast %8 : f32 to vector<8x128xf32>
    %176 = arith.mulf %174, %175 : vector<8x128xf32>
    %177 = arith.index_cast %169 : i32 to index
    %c0_65 = arith.constant 0 : index
    %178 = vector.load %arg8[%177, %c0_65] : memref<192x128xf32, #tpu.memory_space<vmem>>, vector<8x128xf32>
    %179 = arith.index_cast %172 : i32 to index
    %c0_66 = arith.constant 0 : index
    %180 = vector.load %arg8[%179, %c0_66] : memref<192x128xf32, #tpu.memory_space<vmem>>, vector<8x128xf32>
    %181 = vector.shape_cast %178 : vector<8x128xf32> to vector<8x1x128xf32>
    %182 = vector.shape_cast %176 : vector<8x128xf32> to vector<1x8x128xf32>
    %183 = vector.broadcast %181 : vector<8x1x128xf32> to vector<8x8x128xf32>
    %184 = vector.broadcast %182 : vector<1x8x128xf32> to vector<8x8x128xf32>
    %185 = arith.mulf %183, %184 : vector<8x8x128xf32>
    %cst_67 = arith.constant dense<0xFF800000> : vector<8x128xf32>
    %186 = vector.multi_reduction <maximumf>, %185, %cst_67 [0] : vector<8x8x128xf32> to vector<8x128xf32>
    %187 = vector.shape_cast %186 : vector<8x128xf32> to vector<1x8x128xf32>
    %188 = vector.broadcast %187 : vector<1x8x128xf32> to vector<8x8x128xf32>
    %189 = arith.subf %185, %188 : vector<8x8x128xf32>
    %190 = math.exp %189 : vector<8x8x128xf32>
    %cst_68 = arith.constant dense<0.000000e+00> : vector<8x128xf32>
    %191 = vector.multi_reduction <add>, %190, %cst_68 [0] : vector<8x8x128xf32> to vector<8x128xf32>
    %192 = vector.shape_cast %180 : vector<8x128xf32> to vector<8x1x128xf32>
    %193 = vector.broadcast %192 : vector<8x1x128xf32> to vector<8x8x128xf32>
    %194 = arith.mulf %190, %193 : vector<8x8x128xf32>
    %cst_69 = arith.constant dense<0.000000e+00> : vector<8x128xf32>
    %195 = vector.multi_reduction <add>, %194, %cst_69 [0] : vector<8x8x128xf32> to vector<8x128xf32>
    %196 = tpu.reciprocal %191 {approx = true} : vector<8x128xf32> -> vector<8x128xf32>
    %197 = arith.mulf %191, %196 : vector<8x128xf32>
    %cst_70 = arith.constant 2.000000e+00 : f32
    %198 = vector.broadcast %cst_70 : f32 to vector<8x128xf32>
    %199 = arith.subf %198, %197 : vector<8x128xf32>
    %200 = arith.mulf %196, %199 : vector<8x128xf32>
    %201 = arith.mulf %195, %200 : vector<8x128xf32>
    %202 = arith.index_cast %166 : i32 to index
    %c0_71 = arith.constant 0 : index
    %203 = vector.load %arg9[%202, %c0_71] : memref<64x128xf32, #tpu.memory_space<vmem>>, vector<8x128xf32>
    tpu.vector_store %arg9[%202, %c0_71], %201 {strides = array<i32>} : memref<64x128xf32, #tpu.memory_space<vmem>>, vector<8x128xf32>,
    %c5_i32 = arith.constant 5 : i32
    %c8_i32_72 = arith.constant 8 : i32
    %204 = arith.muli %c5_i32, %c8_i32_72 : i32
    %205 = tpu.assume_multiple %204, 8 : i32
    %c8_i32_73 = arith.constant 8 : i32
    %206 = arith.muli %c5_i32, %c8_i32_73 : i32
    %c64_i32_74 = arith.constant 64 : i32
    %207 = arith.addi %c64_i32_74, %206 : i32
    %208 = tpu.assume_multiple %207, 8 : i32
    %c8_i32_75 = arith.constant 8 : i32
    %209 = arith.muli %c5_i32, %c8_i32_75 : i32
    %c128_i32_76 = arith.constant 128 : i32
    %210 = arith.addi %c128_i32_76, %209 : i32
    %211 = tpu.assume_multiple %210, 8 : i32
    %212 = arith.index_cast %205 : i32 to index
    %c0_77 = arith.constant 0 : index
    %213 = vector.load %arg8[%212, %c0_77] : memref<192x128xf32, #tpu.memory_space<vmem>>, vector<8x128xf32>
    %214 = vector.broadcast %8 : f32 to vector<8x128xf32>
    %215 = arith.mulf %213, %214 : vector<8x128xf32>
    %216 = arith.index_cast %208 : i32 to index
    %c0_78 = arith.constant 0 : index
    %217 = vector.load %arg8[%216, %c0_78] : memref<192x128xf32, #tpu.memory_space<vmem>>, vector<8x128xf32>
    %218 = arith.index_cast %211 : i32 to index
    %c0_79 = arith.constant 0 : index
    %219 = vector.load %arg8[%218, %c0_79] : memref<192x128xf32, #tpu.memory_space<vmem>>, vector<8x128xf32>
    %220 = vector.shape_cast %217 : vector<8x128xf32> to vector<8x1x128xf32>
    %221 = vector.shape_cast %215 : vector<8x128xf32> to vector<1x8x128xf32>
    %222 = vector.broadcast %220 : vector<8x1x128xf32> to vector<8x8x128xf32>
    %223 = vector.broadcast %221 : vector<1x8x128xf32> to vector<8x8x128xf32>
    %224 = arith.mulf %222, %223 : vector<8x8x128xf32>
    %cst_80 = arith.constant dense<0xFF800000> : vector<8x128xf32>
    %225 = vector.multi_reduction <maximumf>, %224, %cst_80 [0] : vector<8x8x128xf32> to vector<8x128xf32>
    %226 = vector.shape_cast %225 : vector<8x128xf32> to vector<1x8x128xf32>
    %227 = vector.broadcast %226 : vector<1x8x128xf32> to vector<8x8x128xf32>
    %228 = arith.subf %224, %227 : vector<8x8x128xf32>
    %229 = math.exp %228 : vector<8x8x128xf32>
    %cst_81 = arith.constant dense<0.000000e+00> : vector<8x128xf32>
    %230 = vector.multi_reduction <add>, %229, %cst_81 [0] : vector<8x8x128xf32> to vector<8x128xf32>
    %231 = vector.shape_cast %219 : vector<8x128xf32> to vector<8x1x128xf32>
    %232 = vector.broadcast %231 : vector<8x1x128xf32> to vector<8x8x128xf32>
    %233 = arith.mulf %229, %232 : vector<8x8x128xf32>
    %cst_82 = arith.constant dense<0.000000e+00> : vector<8x128xf32>
    %234 = vector.multi_reduction <add>, %233, %cst_82 [0] : vector<8x8x128xf32> to vector<8x128xf32>
    %235 = tpu.reciprocal %230 {approx = true} : vector<8x128xf32> -> vector<8x128xf32>
    %236 = arith.mulf %230, %235 : vector<8x128xf32>
    %cst_83 = arith.constant 2.000000e+00 : f32
    %237 = vector.broadcast %cst_83 : f32 to vector<8x128xf32>
    %238 = arith.subf %237, %236 : vector<8x128xf32>
    %239 = arith.mulf %235, %238 : vector<8x128xf32>
    %240 = arith.mulf %234, %239 : vector<8x128xf32>
    %241 = arith.index_cast %205 : i32 to index
    %c0_84 = arith.constant 0 : index
    %242 = vector.load %arg9[%241, %c0_84] : memref<64x128xf32, #tpu.memory_space<vmem>>, vector<8x128xf32>
    tpu.vector_store %arg9[%241, %c0_84], %240 {strides = array<i32>} : memref<64x128xf32, #tpu.memory_space<vmem>>, vector<8x128xf32>,
    %c6_i32 = arith.constant 6 : i32
    %c8_i32_85 = arith.constant 8 : i32
    %243 = arith.muli %c6_i32, %c8_i32_85 : i32
    %244 = tpu.assume_multiple %243, 8 : i32
    %c8_i32_86 = arith.constant 8 : i32
    %245 = arith.muli %c6_i32, %c8_i32_86 : i32
    %c64_i32_87 = arith.constant 64 : i32
    %246 = arith.addi %c64_i32_87, %245 : i32
    %247 = tpu.assume_multiple %246, 8 : i32
    %c8_i32_88 = arith.constant 8 : i32
    %248 = arith.muli %c6_i32, %c8_i32_88 : i32
    %c128_i32_89 = arith.constant 128 : i32
    %249 = arith.addi %c128_i32_89, %248 : i32
    %250 = tpu.assume_multiple %249, 8 : i32
    %251 = arith.index_cast %244 : i32 to index
    %c0_90 = arith.constant 0 : index
    %252 = vector.load %arg8[%251, %c0_90] : memref<192x128xf32, #tpu.memory_space<vmem>>, vector<8x128xf32>
    %253 = vector.broadcast %8 : f32 to vector<8x128xf32>
    %254 = arith.mulf %252, %253 : vector<8x128xf32>
    %255 = arith.index_cast %247 : i32 to index
    %c0_91 = arith.constant 0 : index
    %256 = vector.load %arg8[%255, %c0_91] : memref<192x128xf32, #tpu.memory_space<vmem>>, vector<8x128xf32>
    %257 = arith.index_cast %250 : i32 to index
    %c0_92 = arith.constant 0 : index
    %258 = vector.load %arg8[%257, %c0_92] : memref<192x128xf32, #tpu.memory_space<vmem>>, vector<8x128xf32>
    %259 = vector.shape_cast %256 : vector<8x128xf32> to vector<8x1x128xf32>
    %260 = vector.shape_cast %254 : vector<8x128xf32> to vector<1x8x128xf32>
    %261 = vector.broadcast %259 : vector<8x1x128xf32> to vector<8x8x128xf32>
    %262 = vector.broadcast %260 : vector<1x8x128xf32> to vector<8x8x128xf32>
    %263 = arith.mulf %261, %262 : vector<8x8x128xf32>
    %cst_93 = arith.constant dense<0xFF800000> : vector<8x128xf32>
    %264 = vector.multi_reduction <maximumf>, %263, %cst_93 [0] : vector<8x8x128xf32> to vector<8x128xf32>
    %265 = vector.shape_cast %264 : vector<8x128xf32> to vector<1x8x128xf32>
    %266 = vector.broadcast %265 : vector<1x8x128xf32> to vector<8x8x128xf32>
    %267 = arith.subf %263, %266 : vector<8x8x128xf32>
    %268 = math.exp %267 : vector<8x8x128xf32>
    %cst_94 = arith.constant dense<0.000000e+00> : vector<8x128xf32>
    %269 = vector.multi_reduction <add>, %268, %cst_94 [0] : vector<8x8x128xf32> to vector<8x128xf32>
    %270 = vector.shape_cast %258 : vector<8x128xf32> to vector<8x1x128xf32>
    %271 = vector.broadcast %270 : vector<8x1x128xf32> to vector<8x8x128xf32>
    %272 = arith.mulf %268, %271 : vector<8x8x128xf32>
    %cst_95 = arith.constant dense<0.000000e+00> : vector<8x128xf32>
    %273 = vector.multi_reduction <add>, %272, %cst_95 [0] : vector<8x8x128xf32> to vector<8x128xf32>
    %274 = tpu.reciprocal %269 {approx = true} : vector<8x128xf32> -> vector<8x128xf32>
    %275 = arith.mulf %269, %274 : vector<8x128xf32>
    %cst_96 = arith.constant 2.000000e+00 : f32
    %276 = vector.broadcast %cst_96 : f32 to vector<8x128xf32>
    %277 = arith.subf %276, %275 : vector<8x128xf32>
    %278 = arith.mulf %274, %277 : vector<8x128xf32>
    %279 = arith.mulf %273, %278 : vector<8x128xf32>
    %280 = arith.index_cast %244 : i32 to index
    %c0_97 = arith.constant 0 : index
    %281 = vector.load %arg9[%280, %c0_97] : memref<64x128xf32, #tpu.memory_space<vmem>>, vector<8x128xf32>
    tpu.vector_store %arg9[%280, %c0_97], %279 {strides = array<i32>} : memref<64x128xf32, #tpu.memory_space<vmem>>, vector<8x128xf32>,
    %c7_i32 = arith.constant 7 : i32
    %c8_i32_98 = arith.constant 8 : i32
    %282 = arith.muli %c7_i32, %c8_i32_98 : i32
    %283 = tpu.assume_multiple %282, 8 : i32
    %c8_i32_99 = arith.constant 8 : i32
    %284 = arith.muli %c7_i32, %c8_i32_99 : i32
    %c64_i32_100 = arith.constant 64 : i32
    %285 = arith.addi %c64_i32_100, %284 : i32
    %286 = tpu.assume_multiple %285, 8 : i32
    %c8_i32_101 = arith.constant 8 : i32
    %287 = arith.muli %c7_i32, %c8_i32_101 : i32
    %c128_i32_102 = arith.constant 128 : i32
    %288 = arith.addi %c128_i32_102, %287 : i32
    %289 = tpu.assume_multiple %288, 8 : i32
    %290 = arith.index_cast %283 : i32 to index
    %c0_103 = arith.constant 0 : index
    %291 = vector.load %arg8[%290, %c0_103] : memref<192x128xf32, #tpu.memory_space<vmem>>, vector<8x128xf32>
    %292 = vector.broadcast %8 : f32 to vector<8x128xf32>
    %293 = arith.mulf %291, %292 : vector<8x128xf32>
    %294 = arith.index_cast %286 : i32 to index
    %c0_104 = arith.constant 0 : index
    %295 = vector.load %arg8[%294, %c0_104] : memref<192x128xf32, #tpu.memory_space<vmem>>, vector<8x128xf32>
    %296 = arith.index_cast %289 : i32 to index
    %c0_105 = arith.constant 0 : index
    %297 = vector.load %arg8[%296, %c0_105] : memref<192x128xf32, #tpu.memory_space<vmem>>, vector<8x128xf32>
    %298 = vector.shape_cast %295 : vector<8x128xf32> to vector<8x1x128xf32>
    %299 = vector.shape_cast %293 : vector<8x128xf32> to vector<1x8x128xf32>
    %300 = vector.broadcast %298 : vector<8x1x128xf32> to vector<8x8x128xf32>
    %301 = vector.broadcast %299 : vector<1x8x128xf32> to vector<8x8x128xf32>
    %302 = arith.mulf %300, %301 : vector<8x8x128xf32>
    %cst_106 = arith.constant dense<0xFF800000> : vector<8x128xf32>
    %303 = vector.multi_reduction <maximumf>, %302, %cst_106 [0] : vector<8x8x128xf32> to vector<8x128xf32>
    %304 = vector.shape_cast %303 : vector<8x128xf32> to vector<1x8x128xf32>
    %305 = vector.broadcast %304 : vector<1x8x128xf32> to vector<8x8x128xf32>
    %306 = arith.subf %302, %305 : vector<8x8x128xf32>
    %307 = math.exp %306 : vector<8x8x128xf32>
    %cst_107 = arith.constant dense<0.000000e+00> : vector<8x128xf32>
    %308 = vector.multi_reduction <add>, %307, %cst_107 [0] : vector<8x8x128xf32> to vector<8x128xf32>
    %309 = vector.shape_cast %297 : vector<8x128xf32> to vector<8x1x128xf32>
    %310 = vector.broadcast %309 : vector<8x1x128xf32> to vector<8x8x128xf32>
    %311 = arith.mulf %307, %310 : vector<8x8x128xf32>
    %cst_108 = arith.constant dense<0.000000e+00> : vector<8x128xf32>
    %312 = vector.multi_reduction <add>, %311, %cst_108 [0] : vector<8x8x128xf32> to vector<8x128xf32>
    %313 = tpu.reciprocal %308 {approx = true} : vector<8x128xf32> -> vector<8x128xf32>
    %314 = arith.mulf %308, %313 : vector<8x128xf32>
    %cst_109 = arith.constant 2.000000e+00 : f32
    %315 = vector.broadcast %cst_109 : f32 to vector<8x128xf32>
    %316 = arith.subf %315, %314 : vector<8x128xf32>
    %317 = arith.mulf %313, %316 : vector<8x128xf32>
    %318 = arith.mulf %312, %317 : vector<8x128xf32>
    %319 = arith.index_cast %283 : i32 to index
    %c0_110 = arith.constant 0 : index
    %320 = vector.load %arg9[%319, %c0_110] : memref<64x128xf32, #tpu.memory_space<vmem>>, vector<8x128xf32>
    tpu.vector_store %arg9[%319, %c0_110], %318 {strides = array<i32>} : memref<64x128xf32, #tpu.memory_space<vmem>>, vector<8x128xf32>,
    %c8_i32_111 = arith.constant 8 : i32
    %c0_112 = arith.constant 0 : index
    %c0_113 = arith.constant 0 : index
    %321 = vector.load %arg9[%c0_112, %c0_113] : memref<64x128xf32, #tpu.memory_space<vmem>>, vector<64x128xf32>
    %c0_114 = arith.constant 0 : index
    %c0_115 = arith.constant 0 : index
    %322 = vector.load %arg5[%c0_114, %c0_115] : memref<64x64xf32, #tpu.memory_space<vmem>>, vector<64x64xf32>
    %cst_116 = arith.constant dense<0.000000e+00> : vector<128x64xf32>
    %323 = tpu.matmul %321, %322, %cst_116 {dimension_numbers = #tpu.dot_dimension_numbers<[0], [0], [1], [1], [0, 1, 1, 1], [], []>} : vector<64x128xf32>, vector<64x64xf32>, vector<128x64xf32> -> vector<128x64xf32>
    %c0_117 = arith.constant 0 : index
    %c0_118 = arith.constant 0 : index
    %324 = vector.load %arg6[%c0_117, %c0_118] : memref<1x64xf32, #tpu.memory_space<vmem>>, vector<1x64xf32>
    %325 = vector.broadcast %324 : vector<1x64xf32> to vector<128x64xf32>
    %326 = arith.addf %323, %325 : vector<128x64xf32>
    %c0_119 = arith.constant 0 : index
    %c0_120 = arith.constant 0 : index
    %c0_121 = arith.constant 0 : index
    %327 = vector.load %arg7[%c0_119, %c0_120, %c0_121] : memref<1x128x64xf32, #tpu.memory_space<vmem>>, vector<1x128x64xf32>
    %328 = vector.shape_cast %327 : vector<1x128x64xf32> to vector<128x64xf32>
    %329 = vector.shape_cast %326 : vector<128x64xf32> to vector<1x128x64xf32>
    tpu.vector_store %arg7[%c0_119, %c0_120, %c0_121], %329 {strides = array<i32>} : memref<1x128x64xf32, #tpu.memory_space<vmem>>, vector<1x128x64xf32>,
    return
  }
  func.func @transform_0(%arg0: i32, %arg1: i32) -> (i32, i32, i32) {
    %c0_i32 = arith.constant 0 : i32
    %c0_i32_0 = arith.constant 0 : i32
    return %arg0, %arg1, %c0_i32 : i32, i32, i32
  }
  func.func @transform_1(%arg0: i32, %arg1: i32) -> (i32, i32) {
    %c0_i32 = arith.constant 0 : i32
    %c0_i32_0 = arith.constant 0 : i32
    %c0_i32_1 = arith.constant 0 : i32
    return %c0_i32, %c0_i32_0 : i32, i32
  }
  func.func @transform_2(%arg0: i32, %arg1: i32) -> (i32, i32) {
    %c0_i32 = arith.constant 0 : i32
    %c0_i32_0 = arith.constant 0 : i32
    %c0_i32_1 = arith.constant 0 : i32
    return %c0_i32, %c0_i32_0 : i32, i32
  }
  func.func @transform_3(%arg0: i32, %arg1: i32) -> (i32, i32) {
    %c0_i32 = arith.constant 0 : i32
    %c0_i32_0 = arith.constant 0 : i32
    %c0_i32_1 = arith.constant 0 : i32
    return %c0_i32, %c0_i32_0 : i32, i32
  }
  func.func @transform_4(%arg0: i32, %arg1: i32) -> (i32, i32) {
    %c0_i32 = arith.constant 0 : i32
    %c0_i32_0 = arith.constant 0 : i32
    %c0_i32_1 = arith.constant 0 : i32
    return %c0_i32, %c0_i32_0 : i32, i32
  }
  func.func @transform_5(%arg0: i32, %arg1: i32) -> (i32, i32, i32) {
    %c0_i32 = arith.constant 0 : i32
    %c0_i32_0 = arith.constant 0 : i32
    return %arg0, %arg1, %c0_i32 : i32, i32, i32
  }
}

</mosaic_0001>

<llo_original>
// kernel: tpu_custom_call.1
$region0: #{tpu_custom_call.1}
  #allocation0 [shape = 'u32[]', space=smem, size = 0x4, offset = 0x4, fixed_abs, tag = 'smem constant byte address 0x4 - core index']
  #allocation1 [shape = 'u32[72,128]{1,0:T(1,128)}', space=vmem, size = 0x9000, scoped, tag = 'internal scratch']
  #allocation2 [shape = 'f32[192,128]{1,0:T(8,128)}', space=vmem, size = 0x18000, scoped, tag = 'scratch operand']
  #allocation3 [shape = 'f32[64,128]{1,0:T(8,128)}', space=vmem, size = 0x8000, scoped, tag = 'scratch operand']
  %s0 = inlined_call_operand.vmem [shape: f32[2,256,64], index: 0, kind: input, shape index: {}]
  %s1 = inlined_call_operand.vmem [shape: f32[192,64], index: 1, kind: input, shape index: {}]
  %s2 = inlined_call_operand.vmem [shape: f32[192,1], index: 2, kind: input, shape index: {}]
  %s3 = inlined_call_operand.vmem [shape: f32[64,64], index: 3, kind: input, shape index: {}]
  %s4 = inlined_call_operand.vmem [shape: f32[1,64], index: 4, kind: input, shape index: {}]
  %s5 = inlined_call_operand.vmem [shape: f32[2,256,64], index: 5, kind: output, shape index: {}]
  %s6 = sld [smem:[#allocation0]]
  $region53: #{tpu_custom_call.1} parent=0
    _
  %s8 = ssub.s32 1, %s6
  %s9 = scalar_select 0, %s8, %s6
  loop: start=0, step=1, limit=6
  $region2: #{tpu_custom_call.1} parent=0 // loop_pre_header
    _
  $region3: #{tpu_custom_call.1} parent=0 // loop_header
    %s11 = sphi 0, %s15
    %p12 = scmp.ge.s32.totalorder %s11, 6
    %s18 = sphi 0, %s30
    %s19 = sphi 0, %s26
    %s20 = sphi 0, %s18
    %s21 = sphi 0, %s19
    %s22 = sphi 0, %s20
    %s23 = sphi 0, %s21
    %s35 = sphi 0, %s37
    %s38 = sphi 0, %s35
    %s39 = sphi 0, %s38
    %s55 = sphi 0, %s39
    %s59 = sphi 0, %s59
    %s61 = sphi 0, %s59
    %s62 = sphi 0, %s61
    %s76 = sphi 0, %s62
    %s80 = sphi 0, %s80
    %s82 = sphi 0, %s80
    %s83 = sphi 0, %s82
    %s97 = sphi 0, %s83
    %s101 = sphi 0, %s101
    %s103 = sphi 0, %s101
    %s104 = sphi 0, %s103
    %s118 = sphi 0, %s104
    %s122 = sphi 0, %s122
    %s124 = sphi 0, %s122
    %s125 = sphi 0, %s124
    %s139 = sphi 0, %s125
    %s147 = sphi 0, %s149
    %s150 = sphi 0, %s147
    %s151 = sphi 0, %s150
    %s167 = sphi 0, %s151
  $region4: #{tpu_custom_call.1} parent=0 // loop_header_branch
    %14 = sbr.rel (%p12) target = $region8
  $region5: #{tpu_custom_call.1} parent=0 // loop_body
    %s16 = ssub.s32 %s11, 1
    %s17 = ssub.s32 %s11, 2
    %s24 = sadd.s32 1, %s19
    %p25 = scmp.ge.s32.totalorder %s24, 2
    %s26 = scalar_select %p25, 0, %s24
    %s27 = sadd.s32 1, %s18
    %s28 = scalar_select %p25, %s27, %s18
    %p29 = scmp.ge.s32.totalorder %s28, 2
    %s30 = scalar_select %p29, 0, %s28
    %s31 = ssub.s32 %s18, %s30
    %s32 = ssub.s32 %s19, %s26
    %s33 = sor.u32 %s31, %s32
    %p34 = scmp.eq.s32.totalorder %s33, 0
    %s36 = sadd.s32 %s35, 1
    %s37 = scalar_select %p34, %s35, %s36
    %p40 = pneg %p34
    %p41 = scmp.eq.s32.totalorder %s11, 3
    %p42 = por %p40, %p41
    %p43 = scmp.ne.s32.totalorder %s35, %s38
    %p44 = scmp.eq.s32.totalorder %s11, 0
    %p45 = por %p43, %p44
    %p46 = scmp.ne.s32.totalorder %s35, %s38
    %p47 = scmp.eq.s32.totalorder %s16, 3
    %p48 = por %p46, %p47
    %p49 = scmp.ne.s32.totalorder %s38, %s39
    %p50 = scmp.eq.s32.totalorder %s16, 0
    %p51 = por %p49, %p50
    %p52 = scmp.ne.s32.totalorder %s38, %s39
    %p53 = scmp.eq.s32.totalorder %s17, 3
    %p54 = por %p52, %p53
    %p56 = scmp.ne.s32.totalorder %s39, %s55
    %p57 = scmp.eq.s32.totalorder %s17, 0
    %p58 = por %p56, %p57
    %s60 = sadd.s32 %s59, 1
    %p63 = scmp.eq.s32.totalorder %s11, 3
    %p64 = scmp.ne.s32.totalorder %s59, %s61
    %p65 = scmp.eq.s32.totalorder %s11, 0
    %p66 = por %p64, %p65
    %p67 = scmp.ne.s32.totalorder %s59, %s61
    %p68 = scmp.eq.s32.totalorder %s16, 3
    %p69 = por %p67, %p68
    %p70 = scmp.ne.s32.totalorder %s61, %s62
    %p71 = scmp.eq.s32.totalorder %s16, 0
    %p72 = por %p70, %p71
    %p73 = scmp.ne.s32.totalorder %s61, %s62
    %p74 = scmp.eq.s32.totalorder %s17, 3
    %p75 = por %p73, %p74
    %p77 = scmp.ne.s32.totalorder %s62, %s76
    %p78 = scmp.eq.s32.totalorder %s17, 0
    %p79 = por %p77, %p78
    %s81 = sadd.s32 %s80, 1
    %p84 = scmp.eq.s32.totalorder %s11, 3
    %p85 = scmp.ne.s32.totalorder %s80, %s82
    %p86 = scmp.eq.s32.totalorder %s11, 0
    %p87 = por %p85, %p86
    %p88 = scmp.ne.s32.totalorder %s80, %s82
    %p89 = scmp.eq.s32.totalorder %s16, 3
    %p90 = por %p88, %p89
    %p91 = scmp.ne.s32.totalorder %s82, %s83
    %p92 = scmp.eq.s32.totalorder %s16, 0
    %p93 = por %p91, %p92
    %p94 = scmp.ne.s32.totalorder %s82, %s83
    %p95 = scmp.eq.s32.totalorder %s17, 3
    %p96 = por %p94, %p95
    %p98 = scmp.ne.s32.totalorder %s83, %s97
    %p99 = scmp.eq.s32.totalorder %s17, 0
    %p100 = por %p98, %p99
    %s102 = sadd.s32 %s101, 1
    %p105 = scmp.eq.s32.totalorder %s11, 3
    %p106 = scmp.ne.s32.totalorder %s101, %s103
    %p107 = scmp.eq.s32.totalorder %s11, 0
    %p108 = por %p106, %p107
    %p109 = scmp.ne.s32.totalorder %s101, %s103
    %p110 = scmp.eq.s32.totalorder %s16, 3
    %p111 = por %p109, %p110
    %p112 = scmp.ne.s32.totalorder %s103, %s104
    %p113 = scmp.eq.s32.totalorder %s16, 0
    %p114 = por %p112, %p113
    %p115 = scmp.ne.s32.totalorder %s103, %s104
    %p116 = scmp.eq.s32.totalorder %s17, 3
    %p117 = por %p115, %p116
    %p119 = scmp.ne.s32.totalorder %s104, %s118
    %p120 = scmp.eq.s32.totalorder %s17, 0
    %p121 = por %p119, %p120
    %s123 = sadd.s32 %s122, 1
    %p126 = scmp.eq.s32.totalorder %s11, 3
    %p127 = scmp.ne.s32.totalorder %s122, %s124
    %p128 = scmp.eq.s32.totalorder %s11, 0
    %p129 = por %p127, %p128
    %p130 = scmp.ne.s32.totalorder %s122, %s124
    %p131 = scmp.eq.s32.totalorder %s16, 3
    %p132 = por %p130, %p131
    %p133 = scmp.ne.s32.totalorder %s124, %s125
    %p134 = scmp.eq.s32.totalorder %s16, 0
    %p135 = por %p133, %p134
    %p136 = scmp.ne.s32.totalorder %s124, %s125
    %p137 = scmp.eq.s32.totalorder %s17, 3
    %p138 = por %p136, %p137
    %p140 = scmp.ne.s32.totalorder %s125, %s139
    %p141 = scmp.eq.s32.totalorder %s17, 0
    %p142 = por %p140, %p141
    %s143 = ssub.s32 %s18, %s30
    %s144 = ssub.s32 %s19, %s26
    %s145 = sor.u32 %s143, %s144
    %p146 = scmp.eq.s32.totalorder %s145, 0
    %s148 = sadd.s32 %s147, 1
    %s149 = scalar_select %p146, %s147, %s148
    %p152 = pneg %p146
    %p153 = scmp.eq.s32.totalorder %s11, 3
    %p154 = por %p152, %p153
    %p155 = scmp.ne.s32.totalorder %s147, %s150
    %p156 = scmp.eq.s32.totalorder %s11, 0
    %p157 = por %p155, %p156
    %p158 = scmp.ne.s32.totalorder %s147, %s150
    %p159 = scmp.eq.s32.totalorder %s16, 3
    %p160 = por %p158, %p159
    %p161 = scmp.ne.s32.totalorder %s150, %s151
    %p162 = scmp.eq.s32.totalorder %s16, 0
    %p163 = por %p161, %p162
    %p164 = scmp.ne.s32.totalorder %s150, %s151
    %p165 = scmp.eq.s32.totalorder %s17, 3
    %p166 = por %p164, %p165
    %p168 = scmp.ne.s32.totalorder %s151, %s167
    %p169 = scmp.eq.s32.totalorder %s17, 0
    %p170 = por %p168, %p169
    %p171 = scmp.le.s32.totalorder 1, %s11
    %p172 = scmp.lt.s32.totalorder %s11, 5
    %p173 = pnand %p171, %p172
    %p174 = pneg %p173
    // Predicated region
    $region9: #{tpu_custom_call.1} parent=5 // pred_check
      _
    $region10: #{tpu_custom_call.1} parent=5 // pred_check_branch
      %176 = sbr.rel (%p173) target = $region12
    $region11: #{tpu_custom_call.1} parent=5 // pred_region
      %s177 = ssub.s32 %s11, 1
      // Predicated region
      $region13: #{tpu_custom_call.1} parent=11 // pred_check
        %p178 = pneg %p72
      $region14: #{tpu_custom_call.1} parent=11 // pred_check_branch
        %180 = sbr.rel (%p178) target = $region16
      $region15: #{tpu_custom_call.1} parent=11 // pred_region
        _
      $region16: #{tpu_custom_call.1} parent=11 // pred_fallthru
        _
      // Predicated region
      $region17: #{tpu_custom_call.1} parent=11 // pred_check
        %p181 = pneg %p93
      $region18: #{tpu_custom_call.1} parent=11 // pred_check_branch
        %183 = sbr.rel (%p181) target = $region20
      $region19: #{tpu_custom_call.1} parent=11 // pred_region
        _
      $region20: #{tpu_custom_call.1} parent=11 // pred_fallthru
        _
      // Predicated region
      $region21: #{tpu_custom_call.1} parent=11 // pred_check
        %p184 = pneg %p114
      $region22: #{tpu_custom_call.1} parent=11 // pred_check_branch
        %186 = sbr.rel (%p184) target = $region24
      $region23: #{tpu_custom_call.1} parent=11 // pred_region
        _
      $region24: #{tpu_custom_call.1} parent=11 // pred_fallthru
        _
      // Predicated region
      $region25: #{tpu_custom_call.1} parent=11 // pred_check
        %p187 = pneg %p135
      $region26: #{tpu_custom_call.1} parent=11 // pred_check_branch
        %189 = sbr.rel (%p187) target = $region28
      $region27: #{tpu_custom_call.1} parent=11 // pred_region
        _
      $region28: #{tpu_custom_call.1} parent=11 // pred_fallthru
        _
    $region12: #{tpu_custom_call.1} parent=5 // pred_fallthru
      _
    %p190 = scmp.lt.s32.totalorder %s11, 4
    // Predicated region
    $region29: #{tpu_custom_call.1} parent=5 // pred_check
      %p191 = pneg %p190
    $region30: #{tpu_custom_call.1} parent=5 // pred_check_branch
      %193 = sbr.rel (%p191) target = $region32
    $region31: #{tpu_custom_call.1} parent=5 // pred_region
      // Predicated region
      $region33: #{tpu_custom_call.1} parent=31 // pred_check
        %p194 = pneg %p45
      $region34: #{tpu_custom_call.1} parent=31 // pred_check_branch
        %196 = sbr.rel (%p194) target = $region36
      $region35: #{tpu_custom_call.1} parent=31 // pred_region
        %s197 = smul.u32 16, %s19
        %p198 = scmp.lt.s32.totalorder %s18, 1
        %s199 = scalar_select %p198, %s18, 1
        %p200 = scmp.lt.s32.totalorder %s197, 31
        %s201 = scalar_select %p200, %s197, 31
        %s202 = smul.addr %s199, 32
        %s203 = sadd.s32 %s201, %s202
        %s204 = smul.addr %s203, 8
        %s205 = scalar_lea.vmem %s0, %s204
        %s206 = smul.u32 16, %s19
      $region36: #{tpu_custom_call.1} parent=31 // pred_fallthru
        _
    $region32: #{tpu_custom_call.1} parent=5 // pred_fallthru
      _
    %p207 = scmp.le.s32.totalorder 1, %s11
    %p208 = scmp.lt.s32.totalorder %s11, 5
    %p209 = pnand %p207, %p208
    %p210 = pneg %p209
    // Predicated region
    $region37: #{tpu_custom_call.1} parent=5 // pred_check
      _
    $region38: #{tpu_custom_call.1} parent=5 // pred_check_branch
      %212 = sbr.rel (%p209) target = $region40
    $region39: #{tpu_custom_call.1} parent=5 // pred_region
      %s213 = ssub.s32 %s11, 1
      %s214 = smul.u32 16, %s21
      %p215 = scmp.lt.s32.totalorder %s20, 1
      %s216 = scalar_select %p215, %s20, 1
      %p217 = scmp.lt.s32.totalorder %s214, 31
      %s218 = scalar_select %p217, %s214, 31
      %s219 = smul.addr %s216, 32
      %s220 = sadd.s32 %s218, %s219
      %s221 = smul.addr %s220, 8
      %s222 = scalar_lea.vmem %s0, %s221
      %p223 = pneg %p51
      %p224 = pneg %p48
      %p225 = pneg %p72
      %p226 = pneg %p69
      %p227 = pneg %p93
      %p228 = pneg %p90
      %p229 = pneg %p114
      %p230 = pneg %p111
      %p231 = pneg %p135
      %p232 = pneg %p132
      %p233 = pneg %p163
      %p234 = pneg %p160
      %s235 = smul.u32 16, %s21
      %p236 = scmp.lt.s32.totalorder %s20, 1
      %s237 = scalar_select %p236, %s20, 1
      %p238 = scmp.lt.s32.totalorder %s235, 31
      %s239 = scalar_select %p238, %s235, 31
      %s240 = smul.addr %s237, 32
      %s241 = sadd.s32 %s239, %s240
      %s242 = smul.addr %s241, 8
      %s243 = scalar_lea.vmem %s5, %s242
      %s244 = smul.u32 16, %s21
      %p245 = scmp.lt.s32.totalorder %s20, 1
      %s246 = scalar_select %p245, %s20, 1
      %p247 = scmp.lt.s32.totalorder %s244, 31
      %s248 = scalar_select %p247, %s244, 31
      %s249 = smul.addr %s246, 32
      %s250 = sadd.s32 %s248, %s249
      %s251 = smul.addr %s250, 8
      %s252 = scalar_lea.vmem %s0, %s251
      %s253 = smul.u32 16, %s21
      %s254 = smul.u32 16, %s21
      %p255 = scmp.lt.s32.totalorder %s20, 1
      %s256 = scalar_select %p255, %s20, 1
      %p257 = scmp.lt.s32.totalorder %s254, 31
      %s258 = scalar_select %p257, %s254, 31
      %s259 = smul.addr %s256, 32
      %s260 = sadd.s32 %s258, %s259
      %s261 = smul.addr %s260, 8
      %s262 = scalar_lea.vmem %s5, %s261
      %s263 = smul.u32 16, %s21
      %v264 = vld [vmem:[%s252] sm:$0xff]
      %v265 = vld [vmem:[%s252 + $0x8] sm:$0xff]
      %v266 = vld [vmem:[%s252 + $0x10] sm:$0xff]
      %v267 = vld [vmem:[%s252 + $0x18] sm:$0xff]
      %v268 = vld [vmem:[%s252 + $0x20] sm:$0xff]
      %v269 = vld [vmem:[%s252 + $0x28] sm:$0xff]
      %v270 = vld [vmem:[%s252 + $0x30] sm:$0xff]
      %v271 = vld [vmem:[%s252 + $0x38] sm:$0xff]
      %v272 = vld [vmem:[%s252 + $0x40] sm:$0xff]
      %v273 = vld [vmem:[%s252 + $0x48] sm:$0xff]
      %v274 = vld [vmem:[%s252 + $0x50] sm:$0xff]
      %v275 = vld [vmem:[%s252 + $0x58] sm:$0xff]
      %v276 = vld [vmem:[%s252 + $0x60] sm:$0xff]
      %v277 = vld [vmem:[%s252 + $0x68] sm:$0xff]
      %v278 = vld [vmem:[%s252 + $0x70] sm:$0xff]
      %v279 = vld [vmem:[%s252 + $0x78] sm:$0xff]
      %v280 = vld [vmem:[%s1] sm:$0xff]
      %v281 = vld [vmem:[%s1 + $0x8] sm:$0xff]
      %v282 = vld [vmem:[%s1 + $0x10] sm:$0xff]
      %v283 = vld [vmem:[%s1 + $0x18] sm:$0xff]
      %v284 = vld [vmem:[%s1 + $0x20] sm:$0xff]
      %v285 = vld [vmem:[%s1 + $0x28] sm:$0xff]
      %v286 = vld [vmem:[%s1 + $0x30] sm:$0xff]
      %v287 = vld [vmem:[%s1 + $0x38] sm:$0xff]
      %v288 = vld [vmem:[%s1 + $0x40] sm:$0xff]
      %v289 = vld [vmem:[%s1 + $0x48] sm:$0xff]
      %v290 = vld [vmem:[%s1 + $0x50] sm:$0xff]
      %v291 = vld [vmem:[%s1 + $0x58] sm:$0xff]
      %v292 = vld [vmem:[%s1 + $0x60] sm:$0xff]
      %v293 = vld [vmem:[%s1 + $0x68] sm:$0xff]
      %v294 = vld [vmem:[%s1 + $0x70] sm:$0xff]
      %v295 = vld [vmem:[%s1 + $0x78] sm:$0xff]
      %v296 = vld [vmem:[%s1 + $0x80] sm:$0xff]
      %v297 = vld [vmem:[%s1 + $0x88] sm:$0xff]
      %v298 = vld [vmem:[%s1 + $0x90] sm:$0xff]
      %v299 = vld [vmem:[%s1 + $0x98] sm:$0xff]
      %v300 = vld [vmem:[%s1 + $0xa0] sm:$0xff]
      %v301 = vld [vmem:[%s1 + $0xa8] sm:$0xff]
      %v302 = vld [vmem:[%s1 + $0xb0] sm:$0xff]
      %v303 = vld [vmem:[%s1 + $0xb8] sm:$0xff]
      %v304 = vld [vmem:[%s2] sm:$0xff]
      %v305 = vld [vmem:[%s2 + $0x8] sm:$0xff]
      %v306 = vld [vmem:[%s2 + $0x10] sm:$0xff]
      %v307 = vld [vmem:[%s2 + $0x18] sm:$0xff]
      %v308 = vld [vmem:[%s2 + $0x20] sm:$0xff]
      %v309 = vld [vmem:[%s2 + $0x28] sm:$0xff]
      %v310 = vld [vmem:[%s2 + $0x30] sm:$0xff]
      %v311 = vld [vmem:[%s2 + $0x38] sm:$0xff]
      %v312 = vld [vmem:[%s2 + $0x40] sm:$0xff]
      %v313 = vld [vmem:[%s2 + $0x48] sm:$0xff]
      %v314 = vld [vmem:[%s2 + $0x50] sm:$0xff]
      %v315 = vld [vmem:[%s2 + $0x58] sm:$0xff]
      %v316 = vld [vmem:[%s2 + $0x60] sm:$0xff]
      %v317 = vld [vmem:[%s2 + $0x68] sm:$0xff]
      %v318 = vld [vmem:[%s2 + $0x70] sm:$0xff]
      %v319 = vld [vmem:[%s2 + $0x78] sm:$0xff]
      %v320 = vld [vmem:[%s2 + $0x80] sm:$0xff]
      %v321 = vld [vmem:[%s2 + $0x88] sm:$0xff]
      %v322 = vld [vmem:[%s2 + $0x90] sm:$0xff]
      %v323 = vld [vmem:[%s2 + $0x98] sm:$0xff]
      %v324 = vld [vmem:[%s2 + $0xa0] sm:$0xff]
      %v325 = vld [vmem:[%s2 + $0xa8] sm:$0xff]
      %v326 = vld [vmem:[%s2 + $0xb0] sm:$0xff]
      %v327 = vld [vmem:[%s2 + $0xb8] sm:$0xff]
      %329 = vset.pattern.permute.xlu0 0
      %330 = vperm.xlu0 %329, %v304
      %v331 = vpop.permute.xlu0 %330
      %334 = vset.pattern.permute.xlu0 0
      %335 = vperm.xlu0 %334, %v305
      %v336 = vpop.permute.xlu0 %335
      %339 = vset.pattern.permute.xlu0 0
      %340 = vperm.xlu0 %339, %v306
      %v341 = vpop.permute.xlu0 %340
      %344 = vset.pattern.permute.xlu0 0
      %345 = vperm.xlu0 %344, %v307
      %v346 = vpop.permute.xlu0 %345
      %349 = vset.pattern.permute.xlu0 0
      %350 = vperm.xlu0 %349, %v308
      %v351 = vpop.permute.xlu0 %350
      %354 = vset.pattern.permute.xlu0 0
      %355 = vperm.xlu0 %354, %v309
      %v356 = vpop.permute.xlu0 %355
      %359 = vset.pattern.permute.xlu0 0
      %360 = vperm.xlu0 %359, %v310
      %v361 = vpop.permute.xlu0 %360
      %364 = vset.pattern.permute.xlu0 0
      %365 = vperm.xlu0 %364, %v311
      %v366 = vpop.permute.xlu0 %365
      %369 = vset.pattern.permute.xlu0 0
      %370 = vperm.xlu0 %369, %v312
      %v371 = vpop.permute.xlu0 %370
      %374 = vset.pattern.permute.xlu0 0
      %375 = vperm.xlu0 %374, %v313
      %v376 = vpop.permute.xlu0 %375
      %379 = vset.pattern.permute.xlu0 0
      %380 = vperm.xlu0 %379, %v314
      %v381 = vpop.permute.xlu0 %380
      %384 = vset.pattern.permute.xlu0 0
      %385 = vperm.xlu0 %384, %v315
      %v386 = vpop.permute.xlu0 %385
      %389 = vset.pattern.permute.xlu0 0
      %390 = vperm.xlu0 %389, %v316
      %v391 = vpop.permute.xlu0 %390
      %394 = vset.pattern.permute.xlu0 0
      %395 = vperm.xlu0 %394, %v317
      %v396 = vpop.permute.xlu0 %395
      %399 = vset.pattern.permute.xlu0 0
      %400 = vperm.xlu0 %399, %v318
      %v401 = vpop.permute.xlu0 %400
      %404 = vset.pattern.permute.xlu0 0
      %405 = vperm.xlu0 %404, %v319
      %v406 = vpop.permute.xlu0 %405
      %409 = vset.pattern.permute.xlu0 0
      %410 = vperm.xlu0 %409, %v320
      %v411 = vpop.permute.xlu0 %410
      %414 = vset.pattern.permute.xlu0 0
      %415 = vperm.xlu0 %414, %v321
      %v416 = vpop.permute.xlu0 %415
      %419 = vset.pattern.permute.xlu0 0
      %420 = vperm.xlu0 %419, %v322
      %v421 = vpop.permute.xlu0 %420
      %424 = vset.pattern.permute.xlu0 0
      %425 = vperm.xlu0 %424, %v323
      %v426 = vpop.permute.xlu0 %425
      %429 = vset.pattern.permute.xlu0 0
      %430 = vperm.xlu0 %429, %v324
      %v431 = vpop.permute.xlu0 %430
      %434 = vset.pattern.permute.xlu0 0
      %435 = vperm.xlu0 %434, %v325
      %v436 = vpop.permute.xlu0 %435
      %439 = vset.pattern.permute.xlu0 0
      %440 = vperm.xlu0 %439, %v326
      %v441 = vpop.permute.xlu0 %440
      %444 = vset.pattern.permute.xlu0 0
      %445 = vperm.xlu0 %444, %v327
      %v446 = vpop.permute.xlu0 %445
      %vm448 = vcmask 523264
      %v450 = vsel %vm448, %v280, 0
      %v453 = vsel %vm448, %v281, 0
      %v456 = vsel %vm448, %v282, 0
      %v459 = vsel %vm448, %v283, 0
      %v462 = vsel %vm448, %v284, 0
      %v465 = vsel %vm448, %v285, 0
      %v468 = vsel %vm448, %v286, 0
      %v471 = vsel %vm448, %v287, 0
      %v474 = vsel %vm448, %v288, 0
      %v477 = vsel %vm448, %v289, 0
      %v480 = vsel %vm448, %v290, 0
      %v483 = vsel %vm448, %v291, 0
      %v486 = vsel %vm448, %v292, 0
      %v489 = vsel %vm448, %v293, 0
      %v492 = vsel %vm448, %v294, 0
      %v495 = vsel %vm448, %v295, 0
      %v498 = vsel %vm448, %v296, 0
      %v501 = vsel %vm448, %v297, 0
      %v504 = vsel %vm448, %v298, 0
      %v507 = vsel %vm448, %v299, 0
      %v510 = vsel %vm448, %v300, 0
      %v513 = vsel %vm448, %v301, 0
      %v516 = vsel %vm448, %v302, 0
      %v519 = vsel %vm448, %v303, 0
      %v522 = vsel %vm448, %v264, 0
      %v525 = vsel %vm448, %v265, 0
      %v528 = vsel %vm448, %v266, 0
      %v531 = vsel %vm448, %v267, 0
      %v534 = vsel %vm448, %v268, 0
      %v537 = vsel %vm448, %v269, 0
      %v540 = vsel %vm448, %v270, 0
      %v543 = vsel %vm448, %v271, 0
      %v546 = vsel %vm448, %v272, 0
      %v549 = vsel %vm448, %v273, 0
      %v552 = vsel %vm448, %v274, 0
      %v555 = vsel %vm448, %v275, 0
      %v558 = vsel %vm448, %v276, 0
      %v561 = vsel %vm448, %v277, 0
      %v564 = vsel %vm448, %v278, 0
      %v567 = vsel %vm448, %v279, 0
      %569 = vmatpush.xpose.msra.mxu0 %v567
      %570 = vmatpush.xpose.msra.mxu0 %v564
      %571 = vmatpush.xpose.msra.mxu0 %v561
      %572 = vmatpush.xpose.msra.mxu0 %v558
      %573 = vmatpush.xpose.msra.mxu0 %v555
      %574 = vmatpush.xpose.msra.mxu0 %v552
      %575 = vmatpush.xpose.msra.mxu0 %v549
      %576 = vmatpush.xpose.msra.mxu0 %v546
      %577 = vmatpush.xpose.msra.mxu0 %v543
      %578 = vmatpush.xpose.msra.mxu0 %v540
      %579 = vmatpush.xpose.msra.mxu0 %v537
      %580 = vmatpush.xpose.msra.mxu0 %v534
      %581 = vmatpush.xpose.msra.mxu0 %v531
      %582 = vmatpush.xpose.msra.mxu0 %v528
      %583 = vmatpush.xpose.msra.mxu0 %v525
      %584 = vmatpush.xpose.msra.mxu0 %v522
      %585 = vmatmul.f32.gmra.mxu0 %v450
      %v586 = vpop.f32.mrf.mxu0
      %v587 = vadd.f32 %v331, %v586
      %588 = vmatmul.f32.gmra.mxu0 %v453
      %v589 = vpop.f32.mrf.mxu0
      %v590 = vadd.f32 %v336, %v589
      %591 = vmatmul.f32.gmra.mxu0 %v456
      %v592 = vpop.f32.mrf.mxu0
      %v593 = vadd.f32 %v341, %v592
      %594 = vmatmul.f32.gmra.mxu0 %v459
      %v595 = vpop.f32.mrf.mxu0
      %v596 = vadd.f32 %v346, %v595
      %597 = vmatmul.f32.gmra.mxu0 %v462
      %v598 = vpop.f32.mrf.mxu0
      %v599 = vadd.f32 %v351, %v598
      %600 = vmatmul.f32.gmra.mxu0 %v465
      %v601 = vpop.f32.mrf.mxu0
      %v602 = vadd.f32 %v356, %v601
      %603 = vmatmul.f32.gmra.mxu0 %v468
      %v604 = vpop.f32.mrf.mxu0
      %v605 = vadd.f32 %v361, %v604
      %606 = vmatmul.f32.gmra.mxu0 %v471
      %v607 = vpop.f32.mrf.mxu0
      %v608 = vadd.f32 %v366, %v607
      %609 = vmatmul.f32.gmra.mxu0 %v474
      %v610 = vpop.f32.mrf.mxu0
      %v611 = vadd.f32 %v371, %v610
      %612 = vmatmul.f32.gmra.mxu0 %v477
      %v613 = vpop.f32.mrf.mxu0
      %v614 = vadd.f32 %v376, %v613
      %615 = vmatmul.f32.gmra.mxu0 %v480
      %v616 = vpop.f32.mrf.mxu0
      %v617 = vadd.f32 %v381, %v616
      %618 = vmatmul.f32.gmra.mxu0 %v483
      %v619 = vpop.f32.mrf.mxu0
      %v620 = vadd.f32 %v386, %v619
      %621 = vmatmul.f32.gmra.mxu0 %v486
      %v622 = vpop.f32.mrf.mxu0
      %v623 = vadd.f32 %v391, %v622
      %624 = vmatmul.f32.gmra.mxu0 %v489
      %v625 = vpop.f32.mrf.mxu0
      %v626 = vadd.f32 %v396, %v625
      %627 = vmatmul.f32.gmra.mxu0 %v492
      %v628 = vpop.f32.mrf.mxu0
      %v629 = vadd.f32 %v401, %v628
      %630 = vmatmul.f32.gmra.mxu0 %v495
      %v631 = vpop.f32.mrf.mxu0
      %v632 = vadd.f32 %v406, %v631
      %633 = vmatmul.f32.gmra.mxu0 %v498
      %v634 = vpop.f32.mrf.mxu0
      %v635 = vadd.f32 %v411, %v634
      %636 = vmatmul.f32.gmra.mxu0 %v501
      %v637 = vpop.f32.mrf.mxu0
      %v638 = vadd.f32 %v416, %v637
      %639 = vmatmul.f32.gmra.mxu0 %v504
      %v640 = vpop.f32.mrf.mxu0
      %v641 = vadd.f32 %v421, %v640
      %642 = vmatmul.f32.gmra.mxu0 %v507
      %v643 = vpop.f32.mrf.mxu0
      %v644 = vadd.f32 %v426, %v643
      %645 = vmatmul.f32.gmra.mxu0 %v510
      %v646 = vpop.f32.mrf.mxu0
      %v647 = vadd.f32 %v431, %v646
      %648 = vmatmul.f32.gmra.mxu0 %v513
      %v649 = vpop.f32.mrf.mxu0
      %v650 = vadd.f32 %v436, %v649
      %651 = vmatmul.f32.gmra.mxu0 %v516
      %v652 = vpop.f32.mrf.mxu0
      %v653 = vadd.f32 %v441, %v652
      %654 = vmatmul.f32.gmra.mxu0 %v519
      %v655 = vpop.f32.mrf.mxu0
      %v656 = vadd.f32 %v446, %v655
      %657 = vdwg.mxu0
      %658 = vst [vmem:[#allocation2] sm:$0xff] %v587
      %659 = vst [vmem:[#allocation2 + $0x8] sm:$0xff] %v590
      %660 = vst [vmem:[#allocation2 + $0x10] sm:$0xff] %v593
      %661 = vst [vmem:[#allocation2 + $0x18] sm:$0xff] %v596
      %662 = vst [vmem:[#allocation2 + $0x20] sm:$0xff] %v599
      %663 = vst [vmem:[#allocation2 + $0x28] sm:$0xff] %v602
      %664 = vst [vmem:[#allocation2 + $0x30] sm:$0xff] %v605
      %665 = vst [vmem:[#allocation2 + $0x38] sm:$0xff] %v608
      %666 = vst [vmem:[#allocation2 + $0x40] sm:$0xff] %v611
      %667 = vst [vmem:[#allocation2 + $0x48] sm:$0xff] %v614
      %668 = vst [vmem:[#allocation2 + $0x50] sm:$0xff] %v617
      %669 = vst [vmem:[#allocation2 + $0x58] sm:$0xff] %v620
      %670 = vst [vmem:[#allocation2 + $0x60] sm:$0xff] %v623
      %671 = vst [vmem:[#allocation2 + $0x68] sm:$0xff] %v626
      %672 = vst [vmem:[#allocation2 + $0x70] sm:$0xff] %v629
      %673 = vst [vmem:[#allocation2 + $0x78] sm:$0xff] %v632
      %674 = vst [vmem:[#allocation2 + $0x80] sm:$0xff] %v635
      %675 = vst [vmem:[#allocation2 + $0x88] sm:$0xff] %v638
      %676 = vst [vmem:[#allocation2 + $0x90] sm:$0xff] %v641
      %677 = vst [vmem:[#allocation2 + $0x98] sm:$0xff] %v644
      %678 = vst [vmem:[#allocation2 + $0xa0] sm:$0xff] %v647
      %679 = vst [vmem:[#allocation2 + $0xa8] sm:$0xff] %v650
      %680 = vst [vmem:[#allocation2 + $0xb0] sm:$0xff] %v653
      %681 = vst [vmem:[#allocation2 + $0xb8] sm:$0xff] %v656
      %v682 = vld [vmem:[#allocation2] sm:$0xff]
      %v683 = vmul.f32 %v682, 0.125
      %s684 = scalar_lea.vmem [#allocation2], 64
      %v685 = vld [vmem:[%s684] sm:$0xff]
      %s686 = scalar_lea.vmem [#allocation2], 128
      %v687 = vld [vmem:[%s686] sm:$0xff]
      %v689 = vrot.slane %v685, 1
      %v690 = vrot.slane %v685, 2
      %v691 = vrot.slane %v685, 3
      %v692 = vrot.slane %v685, 4
      %v693 = vrot.slane %v685, 5
      %v694 = vrot.slane %v685, 6
      %v695 = vrot.slane %v685, 7
      %v696 = vperm.slane %v685, 0
      %v697 = vperm.slane %v689, 0
      %v698 = vperm.slane %v690, 0
      %v699 = vperm.slane %v691, 0
      %v700 = vperm.slane %v692, 0
      %v701 = vperm.slane %v693, 0
      %v702 = vperm.slane %v694, 0
      %v703 = vperm.slane %v695, 0
      %v712 = vmul.f32 %v696, %v683
      %v713 = vmul.f32 %v697, %v683
      %v714 = vmul.f32 %v698, %v683
      %v715 = vmul.f32 %v699, %v683
      %v716 = vmul.f32 %v700, %v683
      %v717 = vmul.f32 %v701, %v683
      %v718 = vmul.f32 %v702, %v683
      %v719 = vmul.f32 %v703, %v683
      %v720 = vmax.f32 %v712, %v716
      %v721 = vmax.f32 %v713, %v717
      %v722 = vmax.f32 %v714, %v718
      %v723 = vmax.f32 %v715, %v719
      %v724 = vmax.f32 %v720, %v721
      %v725 = vmax.f32 %v722, %v723
      %v726 = vmax.f32 %v724, %v725
      %v727 = vsub.f32 %v712, %v726
      %v728 = vsub.f32 %v713, %v726
      %v729 = vsub.f32 %v714, %v726
      %v730 = vsub.f32 %v715, %v726
      %v731 = vsub.f32 %v716, %v726
      %v732 = vsub.f32 %v717, %v726
      %v733 = vsub.f32 %v718, %v726
      %v734 = vsub.f32 %v719, %v726
      %v735 = vmul.f32 %v727, 1.442695
      %v736 = vpow.pop %v735
      %v737 = vmul.f32 %v728, 1.442695
      %v738 = vpow.pop %v737
      %v739 = vmul.f32 %v729, 1.442695
      %v740 = vpow.pop %v739
      %v741 = vmul.f32 %v730, 1.442695
      %v742 = vpow.pop %v741
      %v743 = vmul.f32 %v731, 1.442695
      %v744 = vpow.pop %v743
      %v745 = vmul.f32 %v732, 1.442695
      %v746 = vpow.pop %v745
      %v747 = vmul.f32 %v733, 1.442695
      %v748 = vpow.pop %v747
      %v749 = vmul.f32 %v734, 1.442695
      %v750 = vpow.pop %v749
      %v751 = vadd.f32 %v736, %v738
      %v752 = vadd.f32 %v751, %v740
      %v753 = vadd.f32 %v752, %v742
      %v754 = vadd.f32 %v753, %v744
      %v755 = vadd.f32 %v754, %v746
      %v756 = vadd.f32 %v755, %v748
      %v757 = vadd.f32 %v756, %v750
      %v759 = vrot.slane %v687, 1
      %v760 = vrot.slane %v687, 2
      %v761 = vrot.slane %v687, 3
      %v762 = vrot.slane %v687, 4
      %v763 = vrot.slane %v687, 5
      %v764 = vrot.slane %v687, 6
      %v765 = vrot.slane %v687, 7
      %v766 = vperm.slane %v687, 0
      %v767 = vperm.slane %v759, 0
      %v768 = vperm.slane %v760, 0
      %v769 = vperm.slane %v761, 0
      %v770 = vperm.slane %v762, 0
      %v771 = vperm.slane %v763, 0
      %v772 = vperm.slane %v764, 0
      %v773 = vperm.slane %v765, 0
      %v782 = vmul.f32 %v736, %v766
      %v783 = vmul.f32 %v738, %v767
      %v784 = vmul.f32 %v740, %v768
      %v785 = vmul.f32 %v742, %v769
      %v786 = vmul.f32 %v744, %v770
      %v787 = vmul.f32 %v746, %v771
      %v788 = vmul.f32 %v748, %v772
      %v789 = vmul.f32 %v750, %v773
      %v790 = vadd.f32 %v782, %v783
      %v791 = vadd.f32 %v790, %v784
      %v792 = vadd.f32 %v791, %v785
      %v793 = vadd.f32 %v792, %v786
      %v794 = vadd.f32 %v793, %v787
      %v795 = vadd.f32 %v794, %v788
      %v796 = vadd.f32 %v795, %v789
      %v797 = vrcp.pop %v757
      %v798 = vmul.f32 %v757, %v797
      %v799 = vsub.f32 2.0, %v798
      %v800 = vmul.f32 %v797, %v799
      %v801 = vmul.f32 %v796, %v800
      %802 = vst [vmem:[#allocation3] sm:$0xff] %v801
      %s803 = scalar_lea.vmem [#allocation2], 8
      %v804 = vld [vmem:[%s803] sm:$0xff]
      %v805 = vmul.f32 %v804, 0.125
      %s806 = scalar_lea.vmem [#allocation2], 72
      %v807 = vld [vmem:[%s806] sm:$0xff]
      %s808 = scalar_lea.vmem [#allocation2], 136
      %v809 = vld [vmem:[%s808] sm:$0xff]
      %v811 = vrot.slane %v807, 1
      %v812 = vrot.slane %v807, 2
      %v813 = vrot.slane %v807, 3
      %v814 = vrot.slane %v807, 4
      %v815 = vrot.slane %v807, 5
      %v816 = vrot.slane %v807, 6
      %v817 = vrot.slane %v807, 7
      %v818 = vperm.slane %v807, 0
      %v819 = vperm.slane %v811, 0
      %v820 = vperm.slane %v812, 0
      %v821 = vperm.slane %v813, 0
      %v822 = vperm.slane %v814, 0
      %v823 = vperm.slane %v815, 0
      %v824 = vperm.slane %v816, 0
      %v825 = vperm.slane %v817, 0
      %v834 = vmul.f32 %v818, %v805
      %v835 = vmul.f32 %v819, %v805
      %v836 = vmul.f32 %v820, %v805
      %v837 = vmul.f32 %v821, %v805
      %v838 = vmul.f32 %v822, %v805
      %v839 = vmul.f32 %v823, %v805
      %v840 = vmul.f32 %v824, %v805
      %v841 = vmul.f32 %v825, %v805
      %v842 = vmax.f32 %v834, %v838
      %v843 = vmax.f32 %v835, %v839
      %v844 = vmax.f32 %v836, %v840
      %v845 = vmax.f32 %v837, %v841
      %v846 = vmax.f32 %v842, %v843
      %v847 = vmax.f32 %v844, %v845
      %v848 = vmax.f32 %v846, %v847
      %v849 = vsub.f32 %v834, %v848
      %v850 = vsub.f32 %v835, %v848
      %v851 = vsub.f32 %v836, %v848
      %v852 = vsub.f32 %v837, %v848
      %v853 = vsub.f32 %v838, %v848
      %v854 = vsub.f32 %v839, %v848
      %v855 = vsub.f32 %v840, %v848
      %v856 = vsub.f32 %v841, %v848
      %v857 = vmul.f32 %v849, 1.442695
      %v858 = vpow.pop %v857
      %v859 = vmul.f32 %v850, 1.442695
      %v860 = vpow.pop %v859
      %v861 = vmul.f32 %v851, 1.442695
      %v862 = vpow.pop %v861
      %v863 = vmul.f32 %v852, 1.442695
      %v864 = vpow.pop %v863
      %v865 = vmul.f32 %v853, 1.442695
      %v866 = vpow.pop %v865
      %v867 = vmul.f32 %v854, 1.442695
      %v868 = vpow.pop %v867
      %v869 = vmul.f32 %v855, 1.442695
      %v870 = vpow.pop %v869
      %v871 = vmul.f32 %v856, 1.442695
      %v872 = vpow.pop %v871
      %v873 = vadd.f32 %v858, %v860
      %v874 = vadd.f32 %v873, %v862
      %v875 = vadd.f32 %v874, %v864
      %v876 = vadd.f32 %v875, %v866
      %v877 = vadd.f32 %v876, %v868
      %v878 = vadd.f32 %v877, %v870
      %v879 = vadd.f32 %v878, %v872
      %v881 = vrot.slane %v809, 1
      %v882 = vrot.slane %v809, 2
      %v883 = vrot.slane %v809, 3
      %v884 = vrot.slane %v809, 4
      %v885 = vrot.slane %v809, 5
      %v886 = vrot.slane %v809, 6
      %v887 = vrot.slane %v809, 7
      %v888 = vperm.slane %v809, 0
      %v889 = vperm.slane %v881, 0
      %v890 = vperm.slane %v882, 0
      %v891 = vperm.slane %v883, 0
      %v892 = vperm.slane %v884, 0
      %v893 = vperm.slane %v885, 0
      %v894 = vperm.slane %v886, 0
      %v895 = vperm.slane %v887, 0
      %v904 = vmul.f32 %v858, %v888
      %v905 = vmul.f32 %v860, %v889
      %v906 = vmul.f32 %v862, %v890
      %v907 = vmul.f32 %v864, %v891
      %v908 = vmul.f32 %v866, %v892
      %v909 = vmul.f32 %v868, %v893
      %v910 = vmul.f32 %v870, %v894
      %v911 = vmul.f32 %v872, %v895
      %v912 = vadd.f32 %v904, %v905
      %v913 = vadd.f32 %v912, %v906
      %v914 = vadd.f32 %v913, %v907
      %v915 = vadd.f32 %v914, %v908
      %v916 = vadd.f32 %v915, %v909
      %v917 = vadd.f32 %v916, %v910
      %v918 = vadd.f32 %v917, %v911
      %v919 = vrcp.pop %v879
      %v920 = vmul.f32 %v879, %v919
      %v921 = vsub.f32 2.0, %v920
      %v922 = vmul.f32 %v919, %v921
      %v923 = vmul.f32 %v918, %v922
      %s924 = scalar_lea.vmem [#allocation3], 8
      %925 = vst [vmem:[%s924] sm:$0xff] %v923
      %s926 = scalar_lea.vmem [#allocation2], 16
      %v927 = vld [vmem:[%s926] sm:$0xff]
      %v928 = vmul.f32 %v927, 0.125
      %s929 = scalar_lea.vmem [#allocation2], 80
      %v930 = vld [vmem:[%s929] sm:$0xff]
      %s931 = scalar_lea.vmem [#allocation2], 144
      %v932 = vld [vmem:[%s931] sm:$0xff]
      %v934 = vrot.slane %v930, 1
      %v935 = vrot.slane %v930, 2
      %v936 = vrot.slane %v930, 3
      %v937 = vrot.slane %v930, 4
      %v938 = vrot.slane %v930, 5
      %v939 = vrot.slane %v930, 6
      %v940 = vrot.slane %v930, 7
      %v941 = vperm.slane %v930, 0
      %v942 = vperm.slane %v934, 0
      %v943 = vperm.slane %v935, 0
      %v944 = vperm.slane %v936, 0
      %v945 = vperm.slane %v937, 0
      %v946 = vperm.slane %v938, 0
      %v947 = vperm.slane %v939, 0
      %v948 = vperm.slane %v940, 0
      %v957 = vmul.f32 %v941, %v928
      %v958 = vmul.f32 %v942, %v928
      %v959 = vmul.f32 %v943, %v928
      %v960 = vmul.f32 %v944, %v928
      %v961 = vmul.f32 %v945, %v928
      %v962 = vmul.f32 %v946, %v928
      %v963 = vmul.f32 %v947, %v928
      %v964 = vmul.f32 %v948, %v928
      %v965 = vmax.f32 %v957, %v961
      %v966 = vmax.f32 %v958, %v962
      %v967 = vmax.f32 %v959, %v963
      %v968 = vmax.f32 %v960, %v964
      %v969 = vmax.f32 %v965, %v966
      %v970 = vmax.f32 %v967, %v968
      %v971 = vmax.f32 %v969, %v970
      %v972 = vsub.f32 %v957, %v971
      %v973 = vsub.f32 %v958, %v971
      %v974 = vsub.f32 %v959, %v971
      %v975 = vsub.f32 %v960, %v971
      %v976 = vsub.f32 %v961, %v971
      %v977 = vsub.f32 %v962, %v971
      %v978 = vsub.f32 %v963, %v971
      %v979 = vsub.f32 %v964, %v971
      %v980 = vmul.f32 %v972, 1.442695
      %v981 = vpow.pop %v980
      %v982 = vmul.f32 %v973, 1.442695
      %v983 = vpow.pop %v982
      %v984 = vmul.f32 %v974, 1.442695
      %v985 = vpow.pop %v984
      %v986 = vmul.f32 %v975, 1.442695
      %v987 = vpow.pop %v986
      %v988 = vmul.f32 %v976, 1.442695
      %v989 = vpow.pop %v988
      %v990 = vmul.f32 %v977, 1.442695
      %v991 = vpow.pop %v990
      %v992 = vmul.f32 %v978, 1.442695
      %v993 = vpow.pop %v992
      %v994 = vmul.f32 %v979, 1.442695
      %v995 = vpow.pop %v994
      %v996 = vadd.f32 %v981, %v983
      %v997 = vadd.f32 %v996, %v985
      %v998 = vadd.f32 %v997, %v987
      %v999 = vadd.f32 %v998, %v989
      %v1000 = vadd.f32 %v999, %v991
      %v1001 = vadd.f32 %v1000, %v993
      %v1002 = vadd.f32 %v1001, %v995
      %v1004 = vrot.slane %v932, 1
      %v1005 = vrot.slane %v932, 2
      %v1006 = vrot.slane %v932, 3
      %v1007 = vrot.slane %v932, 4
      %v1008 = vrot.slane %v932, 5
      %v1009 = vrot.slane %v932, 6
      %v1010 = vrot.slane %v932, 7
      %v1011 = vperm.slane %v932, 0
      %v1012 = vperm.slane %v1004, 0
      %v1013 = vperm.slane %v1005, 0
      %v1014 = vperm.slane %v1006, 0
      %v1015 = vperm.slane %v1007, 0
      %v1016 = vperm.slane %v1008, 0
      %v1017 = vperm.slane %v1009, 0
      %v1018 = vperm.slane %v1010, 0
      %v1027 = vmul.f32 %v981, %v1011
      %v1028 = vmul.f32 %v983, %v1012
      %v1029 = vmul.f32 %v985, %v1013
      %v1030 = vmul.f32 %v987, %v1014
      %v1031 = vmul.f32 %v989, %v1015
      %v1032 = vmul.f32 %v991, %v1016
      %v1033 = vmul.f32 %v993, %v1017
      %v1034 = vmul.f32 %v995, %v1018
      %v1035 = vadd.f32 %v1027, %v1028
      %v1036 = vadd.f32 %v1035, %v1029
      %v1037 = vadd.f32 %v1036, %v1030
      %v1038 = vadd.f32 %v1037, %v1031
      %v1039 = vadd.f32 %v1038, %v1032
      %v1040 = vadd.f32 %v1039, %v1033
      %v1041 = vadd.f32 %v1040, %v1034
      %v1042 = vrcp.pop %v1002
      %v1043 = vmul.f32 %v1002, %v1042
      %v1044 = vsub.f32 2.0, %v1043
      %v1045 = vmul.f32 %v1042, %v1044
      %v1046 = vmul.f32 %v1041, %v1045
      %s1047 = scalar_lea.vmem [#allocation3], 16
      %1048 = vst [vmem:[%s1047] sm:$0xff] %v1046
      %s1049 = scalar_lea.vmem [#allocation2], 24
      %v1050 = vld [vmem:[%s1049] sm:$0xff]
      %v1051 = vmul.f32 %v1050, 0.125
      %s1052 = scalar_lea.vmem [#allocation2], 88
      %v1053 = vld [vmem:[%s1052] sm:$0xff]
      %s1054 = scalar_lea.vmem [#allocation2], 152
      %v1055 = vld [vmem:[%s1054] sm:$0xff]
      %v1057 = vrot.slane %v1053, 1
      %v1058 = vrot.slane %v1053, 2
      %v1059 = vrot.slane %v1053, 3
      %v1060 = vrot.slane %v1053, 4
      %v1061 = vrot.slane %v1053, 5
      %v1062 = vrot.slane %v1053, 6
      %v1063 = vrot.slane %v1053, 7
      %v1064 = vperm.slane %v1053, 0
      %v1065 = vperm.slane %v1057, 0
      %v1066 = vperm.slane %v1058, 0
      %v1067 = vperm.slane %v1059, 0
      %v1068 = vperm.slane %v1060, 0
      %v1069 = vperm.slane %v1061, 0
      %v1070 = vperm.slane %v1062, 0
      %v1071 = vperm.slane %v1063, 0
      %v1080 = vmul.f32 %v1064, %v1051
      %v1081 = vmul.f32 %v1065, %v1051
      %v1082 = vmul.f32 %v1066, %v1051
      %v1083 = vmul.f32 %v1067, %v1051
      %v1084 = vmul.f32 %v1068, %v1051
      %v1085 = vmul.f32 %v1069, %v1051
      %v1086 = vmul.f32 %v1070, %v1051
      %v1087 = vmul.f32 %v1071, %v1051
      %v1088 = vmax.f32 %v1080, %v1084
      %v1089 = vmax.f32 %v1081, %v1085
      %v1090 = vmax.f32 %v1082, %v1086
      %v1091 = vmax.f32 %v1083, %v1087
      %v1092 = vmax.f32 %v1088, %v1089
      %v1093 = vmax.f32 %v1090, %v1091
      %v1094 = vmax.f32 %v1092, %v1093
      %v1095 = vsub.f32 %v1080, %v1094
      %v1096 = vsub.f32 %v1081, %v1094
      %v1097 = vsub.f32 %v1082, %v1094
      %v1098 = vsub.f32 %v1083, %v1094
      %v1099 = vsub.f32 %v1084, %v1094
      %v1100 = vsub.f32 %v1085, %v1094
      %v1101 = vsub.f32 %v1086, %v1094
      %v1102 = vsub.f32 %v1087, %v1094
      %v1103 = vmul.f32 %v1095, 1.442695
      %v1104 = vpow.pop %v1103
      %v1105 = vmul.f32 %v1096, 1.442695
      %v1106 = vpow.pop %v1105
      %v1107 = vmul.f32 %v1097, 1.442695
      %v1108 = vpow.pop %v1107
      %v1109 = vmul.f32 %v1098, 1.442695
      %v1110 = vpow.pop %v1109
      %v1111 = vmul.f32 %v1099, 1.442695
      %v1112 = vpow.pop %v1111
      %v1113 = vmul.f32 %v1100, 1.442695
      %v1114 = vpow.pop %v1113
      %v1115 = vmul.f32 %v1101, 1.442695
      %v1116 = vpow.pop %v1115
      %v1117 = vmul.f32 %v1102, 1.442695
      %v1118 = vpow.pop %v1117
      %v1119 = vadd.f32 %v1104, %v1106
      %v1120 = vadd.f32 %v1119, %v1108
      %v1121 = vadd.f32 %v1120, %v1110
      %v1122 = vadd.f32 %v1121, %v1112
      %v1123 = vadd.f32 %v1122, %v1114
      %v1124 = vadd.f32 %v1123, %v1116
      %v1125 = vadd.f32 %v1124, %v1118
      %v1127 = vrot.slane %v1055, 1
      %v1128 = vrot.slane %v1055, 2
      %v1129 = vrot.slane %v1055, 3
      %v1130 = vrot.slane %v1055, 4
      %v1131 = vrot.slane %v1055, 5
      %v1132 = vrot.slane %v1055, 6
      %v1133 = vrot.slane %v1055, 7
      %v1134 = vperm.slane %v1055, 0
      %v1135 = vperm.slane %v1127, 0
      %v1136 = vperm.slane %v1128, 0
      %v1137 = vperm.slane %v1129, 0
      %v1138 = vperm.slane %v1130, 0
      %v1139 = vperm.slane %v1131, 0
      %v1140 = vperm.slane %v1132, 0
      %v1141 = vperm.slane %v1133, 0
      %v1150 = vmul.f32 %v1104, %v1134
      %v1151 = vmul.f32 %v1106, %v1135
      %v1152 = vmul.f32 %v1108, %v1136
      %v1153 = vmul.f32 %v1110, %v1137
      %v1154 = vmul.f32 %v1112, %v1138
      %v1155 = vmul.f32 %v1114, %v1139
      %v1156 = vmul.f32 %v1116, %v1140
      %v1157 = vmul.f32 %v1118, %v1141
      %v1158 = vadd.f32 %v1150, %v1151
      %v1159 = vadd.f32 %v1158, %v1152
      %v1160 = vadd.f32 %v1159, %v1153
      %v1161 = vadd.f32 %v1160, %v1154
      %v1162 = vadd.f32 %v1161, %v1155
      %v1163 = vadd.f32 %v1162, %v1156
      %v1164 = vadd.f32 %v1163, %v1157
      %v1165 = vrcp.pop %v1125
      %v1166 = vmul.f32 %v1125, %v1165
      %v1167 = vsub.f32 2.0, %v1166
      %v1168 = vmul.f32 %v1165, %v1167
      %v1169 = vmul.f32 %v1164, %v1168
      %s1170 = scalar_lea.vmem [#allocation3], 24
      %1171 = vst [vmem:[%s1170] sm:$0xff] %v1169
      %s1172 = scalar_lea.vmem [#allocation2], 32
      %v1173 = vld [vmem:[%s1172] sm:$0xff]
      %v1174 = vmul.f32 %v1173, 0.125
      %s1175 = scalar_lea.vmem [#allocation2], 96
      %v1176 = vld [vmem:[%s1175] sm:$0xff]
      %s1177 = scalar_lea.vmem [#allocation2], 160
      %v1178 = vld [vmem:[%s1177] sm:$0xff]
      %v1180 = vrot.slane %v1176, 1
      %v1181 = vrot.slane %v1176, 2
      %v1182 = vrot.slane %v1176, 3
      %v1183 = vrot.slane %v1176, 4
      %v1184 = vrot.slane %v1176, 5
      %v1185 = vrot.slane %v1176, 6
      %v1186 = vrot.slane %v1176, 7
      %v1187 = vperm.slane %v1176, 0
      %v1188 = vperm.slane %v1180, 0
      %v1189 = vperm.slane %v1181, 0
      %v1190 = vperm.slane %v1182, 0
      %v1191 = vperm.slane %v1183, 0
      %v1192 = vperm.slane %v1184, 0
      %v1193 = vperm.slane %v1185, 0
      %v1194 = vperm.slane %v1186, 0
      %v1203 = vmul.f32 %v1187, %v1174
      %v1204 = vmul.f32 %v1188, %v1174
      %v1205 = vmul.f32 %v1189, %v1174
      %v1206 = vmul.f32 %v1190, %v1174
      %v1207 = vmul.f32 %v1191, %v1174
      %v1208 = vmul.f32 %v1192, %v1174
      %v1209 = vmul.f32 %v1193, %v1174
      %v1210 = vmul.f32 %v1194, %v1174
      %v1211 = vmax.f32 %v1203, %v1207
      %v1212 = vmax.f32 %v1204, %v1208
      %v1213 = vmax.f32 %v1205, %v1209
      %v1214 = vmax.f32 %v1206, %v1210
      %v1215 = vmax.f32 %v1211, %v1212
      %v1216 = vmax.f32 %v1213, %v1214
      %v1217 = vmax.f32 %v1215, %v1216
      %v1218 = vsub.f32 %v1203, %v1217
      %v1219 = vsub.f32 %v1204, %v1217
      %v1220 = vsub.f32 %v1205, %v1217
      %v1221 = vsub.f32 %v1206, %v1217
      %v1222 = vsub.f32 %v1207, %v1217
      %v1223 = vsub.f32 %v1208, %v1217
      %v1224 = vsub.f32 %v1209, %v1217
      %v1225 = vsub.f32 %v1210, %v1217
      %v1226 = vmul.f32 %v1218, 1.442695
      %v1227 = vpow.pop %v1226
      %v1228 = vmul.f32 %v1219, 1.442695
      %v1229 = vpow.pop %v1228
      %v1230 = vmul.f32 %v1220, 1.442695
      %v1231 = vpow.pop %v1230
      %v1232 = vmul.f32 %v1221, 1.442695
      %v1233 = vpow.pop %v1232
      %v1234 = vmul.f32 %v1222, 1.442695
      %v1235 = vpow.pop %v1234
      %v1236 = vmul.f32 %v1223, 1.442695
      %v1237 = vpow.pop %v1236
      %v1238 = vmul.f32 %v1224, 1.442695
      %v1239 = vpow.pop %v1238
      %v1240 = vmul.f32 %v1225, 1.442695
      %v1241 = vpow.pop %v1240
      %v1242 = vadd.f32 %v1227, %v1229
      %v1243 = vadd.f32 %v1242, %v1231
      %v1244 = vadd.f32 %v1243, %v1233
      %v1245 = vadd.f32 %v1244, %v1235
      %v1246 = vadd.f32 %v1245, %v1237
      %v1247 = vadd.f32 %v1246, %v1239
      %v1248 = vadd.f32 %v1247, %v1241
      %v1250 = vrot.slane %v1178, 1
      %v1251 = vrot.slane %v1178, 2
      %v1252 = vrot.slane %v1178, 3
      %v1253 = vrot.slane %v1178, 4
      %v1254 = vrot.slane %v1178, 5
      %v1255 = vrot.slane %v1178, 6
      %v1256 = vrot.slane %v1178, 7
      %v1257 = vperm.slane %v1178, 0
      %v1258 = vperm.slane %v1250, 0
      %v1259 = vperm.slane %v1251, 0
      %v1260 = vperm.slane %v1252, 0
      %v1261 = vperm.slane %v1253, 0
      %v1262 = vperm.slane %v1254, 0
      %v1263 = vperm.slane %v1255, 0
      %v1264 = vperm.slane %v1256, 0
      %v1273 = vmul.f32 %v1227, %v1257
      %v1274 = vmul.f32 %v1229, %v1258
      %v1275 = vmul.f32 %v1231, %v1259
      %v1276 = vmul.f32 %v1233, %v1260
      %v1277 = vmul.f32 %v1235, %v1261
      %v1278 = vmul.f32 %v1237, %v1262
      %v1279 = vmul.f32 %v1239, %v1263
      %v1280 = vmul.f32 %v1241, %v1264
      %v1281 = vadd.f32 %v1273, %v1274
      %v1282 = vadd.f32 %v1281, %v1275
      %v1283 = vadd.f32 %v1282, %v1276
      %v1284 = vadd.f32 %v1283, %v1277
      %v1285 = vadd.f32 %v1284, %v1278
      %v1286 = vadd.f32 %v1285, %v1279
      %v1287 = vadd.f32 %v1286, %v1280
      %v1288 = vrcp.pop %v1248
      %v1289 = vmul.f32 %v1248, %v1288
      %v1290 = vsub.f32 2.0, %v1289
      %v1291 = vmul.f32 %v1288, %v1290
      %v1292 = vmul.f32 %v1287, %v1291
      %s1293 = scalar_lea.vmem [#allocation3], 32
      %1294 = vst [vmem:[%s1293] sm:$0xff] %v1292
      %s1295 = scalar_lea.vmem [#allocation2], 40
      %v1296 = vld [vmem:[%s1295] sm:$0xff]
      %v1297 = vmul.f32 %v1296, 0.125
      %s1298 = scalar_lea.vmem [#allocation2], 104
      %v1299 = vld [vmem:[%s1298] sm:$0xff]
      %s1300 = scalar_lea.vmem [#allocation2], 168
      %v1301 = vld [vmem:[%s1300] sm:$0xff]
      %v1303 = vrot.slane %v1299, 1
      %v1304 = vrot.slane %v1299, 2
      %v1305 = vrot.slane %v1299, 3
      %v1306 = vrot.slane %v1299, 4
      %v1307 = vrot.slane %v1299, 5
      %v1308 = vrot.slane %v1299, 6
      %v1309 = vrot.slane %v1299, 7
      %v1310 = vperm.slane %v1299, 0
      %v1311 = vperm.slane %v1303, 0
      %v1312 = vperm.slane %v1304, 0
      %v1313 = vperm.slane %v1305, 0
      %v1314 = vperm.slane %v1306, 0
      %v1315 = vperm.slane %v1307, 0
      %v1316 = vperm.slane %v1308, 0
      %v1317 = vperm.slane %v1309, 0
      %v1326 = vmul.f32 %v1310, %v1297
      %v1327 = vmul.f32 %v1311, %v1297
      %v1328 = vmul.f32 %v1312, %v1297
      %v1329 = vmul.f32 %v1313, %v1297
      %v1330 = vmul.f32 %v1314, %v1297
      %v1331 = vmul.f32 %v1315, %v1297
      %v1332 = vmul.f32 %v1316, %v1297
      %v1333 = vmul.f32 %v1317, %v1297
      %v1334 = vmax.f32 %v1326, %v1330
      %v1335 = vmax.f32 %v1327, %v1331
      %v1336 = vmax.f32 %v1328, %v1332
      %v1337 = vmax.f32 %v1329, %v1333
      %v1338 = vmax.f32 %v1334, %v1335
      %v1339 = vmax.f32 %v1336, %v1337
      %v1340 = vmax.f32 %v1338, %v1339
      %v1341 = vsub.f32 %v1326, %v1340
      %v1342 = vsub.f32 %v1327, %v1340
      %v1343 = vsub.f32 %v1328, %v1340
      %v1344 = vsub.f32 %v1329, %v1340
      %v1345 = vsub.f32 %v1330, %v1340
      %v1346 = vsub.f32 %v1331, %v1340
      %v1347 = vsub.f32 %v1332, %v1340
      %v1348 = vsub.f32 %v1333, %v1340
      %v1349 = vmul.f32 %v1341, 1.442695
      %v1350 = vpow.pop %v1349
      %v1351 = vmul.f32 %v1342, 1.442695
      %v1352 = vpow.pop %v1351
      %v1353 = vmul.f32 %v1343, 1.442695
      %v1354 = vpow.pop %v1353
      %v1355 = vmul.f32 %v1344, 1.442695
      %v1356 = vpow.pop %v1355
      %v1357 = vmul.f32 %v1345, 1.442695
      %v1358 = vpow.pop %v1357
      %v1359 = vmul.f32 %v1346, 1.442695
      %v1360 = vpow.pop %v1359
      %v1361 = vmul.f32 %v1347, 1.442695
      %v1362 = vpow.pop %v1361
      %v1363 = vmul.f32 %v1348, 1.442695
      %v1364 = vpow.pop %v1363
      %v1365 = vadd.f32 %v1350, %v1352
      %v1366 = vadd.f32 %v1365, %v1354
      %v1367 = vadd.f32 %v1366, %v1356
      %v1368 = vadd.f32 %v1367, %v1358
      %v1369 = vadd.f32 %v1368, %v1360
      %v1370 = vadd.f32 %v1369, %v1362
      %v1371 = vadd.f32 %v1370, %v1364
      %v1373 = vrot.slane %v1301, 1
      %v1374 = vrot.slane %v1301, 2
      %v1375 = vrot.slane %v1301, 3
      %v1376 = vrot.slane %v1301, 4
      %v1377 = vrot.slane %v1301, 5
      %v1378 = vrot.slane %v1301, 6
      %v1379 = vrot.slane %v1301, 7
      %v1380 = vperm.slane %v1301, 0
      %v1381 = vperm.slane %v1373, 0
      %v1382 = vperm.slane %v1374, 0
      %v1383 = vperm.slane %v1375, 0
      %v1384 = vperm.slane %v1376, 0
      %v1385 = vperm.slane %v1377, 0
      %v1386 = vperm.slane %v1378, 0
      %v1387 = vperm.slane %v1379, 0
      %v1396 = vmul.f32 %v1350, %v1380
      %v1397 = vmul.f32 %v1352, %v1381
      %v1398 = vmul.f32 %v1354, %v1382
      %v1399 = vmul.f32 %v1356, %v1383
      %v1400 = vmul.f32 %v1358, %v1384
      %v1401 = vmul.f32 %v1360, %v1385
      %v1402 = vmul.f32 %v1362, %v1386
      %v1403 = vmul.f32 %v1364, %v1387
      %v1404 = vadd.f32 %v1396, %v1397
      %v1405 = vadd.f32 %v1404, %v1398
      %v1406 = vadd.f32 %v1405, %v1399
      %v1407 = vadd.f32 %v1406, %v1400
      %v1408 = vadd.f32 %v1407, %v1401
      %v1409 = vadd.f32 %v1408, %v1402
      %v1410 = vadd.f32 %v1409, %v1403
      %v1411 = vrcp.pop %v1371
      %v1412 = vmul.f32 %v1371, %v1411
      %v1413 = vsub.f32 2.0, %v1412
      %v1414 = vmul.f32 %v1411, %v1413
      %v1415 = vmul.f32 %v1410, %v1414
      %s1416 = scalar_lea.vmem [#allocation3], 40
      %1417 = vst [vmem:[%s1416] sm:$0xff] %v1415
      %s1418 = scalar_lea.vmem [#allocation2], 48
      %v1419 = vld [vmem:[%s1418] sm:$0xff]
      %v1420 = vmul.f32 %v1419, 0.125
      %s1421 = scalar_lea.vmem [#allocation2], 112
      %v1422 = vld [vmem:[%s1421] sm:$0xff]
      %s1423 = scalar_lea.vmem [#allocation2], 176
      %v1424 = vld [vmem:[%s1423] sm:$0xff]
      %v1426 = vrot.slane %v1422, 1
      %v1427 = vrot.slane %v1422, 2
      %v1428 = vrot.slane %v1422, 3
      %v1429 = vrot.slane %v1422, 4
      %v1430 = vrot.slane %v1422, 5
      %v1431 = vrot.slane %v1422, 6
      %v1432 = vrot.slane %v1422, 7
      %v1433 = vperm.slane %v1422, 0
      %v1434 = vperm.slane %v1426, 0
      %v1435 = vperm.slane %v1427, 0
      %v1436 = vperm.slane %v1428, 0
      %v1437 = vperm.slane %v1429, 0
      %v1438 = vperm.slane %v1430, 0
      %v1439 = vperm.slane %v1431, 0
      %v1440 = vperm.slane %v1432, 0
      %v1449 = vmul.f32 %v1433, %v1420
      %v1450 = vmul.f32 %v1434, %v1420
      %v1451 = vmul.f32 %v1435, %v1420
      %v1452 = vmul.f32 %v1436, %v1420
      %v1453 = vmul.f32 %v1437, %v1420
      %v1454 = vmul.f32 %v1438, %v1420
      %v1455 = vmul.f32 %v1439, %v1420
      %v1456 = vmul.f32 %v1440, %v1420
      %v1457 = vmax.f32 %v1449, %v1453
      %v1458 = vmax.f32 %v1450, %v1454
      %v1459 = vmax.f32 %v1451, %v1455
      %v1460 = vmax.f32 %v1452, %v1456
      %v1461 = vmax.f32 %v1457, %v1458
      %v1462 = vmax.f32 %v1459, %v1460
      %v1463 = vmax.f32 %v1461, %v1462
      %v1464 = vsub.f32 %v1449, %v1463
      %v1465 = vsub.f32 %v1450, %v1463
      %v1466 = vsub.f32 %v1451, %v1463
      %v1467 = vsub.f32 %v1452, %v1463
      %v1468 = vsub.f32 %v1453, %v1463
      %v1469 = vsub.f32 %v1454, %v1463
      %v1470 = vsub.f32 %v1455, %v1463
      %v1471 = vsub.f32 %v1456, %v1463
      %v1472 = vmul.f32 %v1464, 1.442695
      %v1473 = vpow.pop %v1472
      %v1474 = vmul.f32 %v1465, 1.442695
      %v1475 = vpow.pop %v1474
      %v1476 = vmul.f32 %v1466, 1.442695
      %v1477 = vpow.pop %v1476
      %v1478 = vmul.f32 %v1467, 1.442695
      %v1479 = vpow.pop %v1478
      %v1480 = vmul.f32 %v1468, 1.442695
      %v1481 = vpow.pop %v1480
      %v1482 = vmul.f32 %v1469, 1.442695
      %v1483 = vpow.pop %v1482
      %v1484 = vmul.f32 %v1470, 1.442695
      %v1485 = vpow.pop %v1484
      %v1486 = vmul.f32 %v1471, 1.442695
      %v1487 = vpow.pop %v1486
      %v1488 = vadd.f32 %v1473, %v1475
      %v1489 = vadd.f32 %v1488, %v1477
      %v1490 = vadd.f32 %v1489, %v1479
      %v1491 = vadd.f32 %v1490, %v1481
      %v1492 = vadd.f32 %v1491, %v1483
      %v1493 = vadd.f32 %v1492, %v1485
      %v1494 = vadd.f32 %v1493, %v1487
      %v1496 = vrot.slane %v1424, 1
      %v1497 = vrot.slane %v1424, 2
      %v1498 = vrot.slane %v1424, 3
      %v1499 = vrot.slane %v1424, 4
      %v1500 = vrot.slane %v1424, 5
      %v1501 = vrot.slane %v1424, 6
      %v1502 = vrot.slane %v1424, 7
      %v1503 = vperm.slane %v1424, 0
      %v1504 = vperm.slane %v1496, 0
      %v1505 = vperm.slane %v1497, 0
      %v1506 = vperm.slane %v1498, 0
      %v1507 = vperm.slane %v1499, 0
      %v1508 = vperm.slane %v1500, 0
      %v1509 = vperm.slane %v1501, 0
      %v1510 = vperm.slane %v1502, 0
      %v1519 = vmul.f32 %v1473, %v1503
      %v1520 = vmul.f32 %v1475, %v1504
      %v1521 = vmul.f32 %v1477, %v1505
      %v1522 = vmul.f32 %v1479, %v1506
      %v1523 = vmul.f32 %v1481, %v1507
      %v1524 = vmul.f32 %v1483, %v1508
      %v1525 = vmul.f32 %v1485, %v1509
      %v1526 = vmul.f32 %v1487, %v1510
      %v1527 = vadd.f32 %v1519, %v1520
      %v1528 = vadd.f32 %v1527, %v1521
      %v1529 = vadd.f32 %v1528, %v1522
      %v1530 = vadd.f32 %v1529, %v1523
      %v1531 = vadd.f32 %v1530, %v1524
      %v1532 = vadd.f32 %v1531, %v1525
      %v1533 = vadd.f32 %v1532, %v1526
      %v1534 = vrcp.pop %v1494
      %v1535 = vmul.f32 %v1494, %v1534
      %v1536 = vsub.f32 2.0, %v1535
      %v1537 = vmul.f32 %v1534, %v1536
      %v1538 = vmul.f32 %v1533, %v1537
      %s1539 = scalar_lea.vmem [#allocation3], 48
      %1540 = vst [vmem:[%s1539] sm:$0xff] %v1538
      %s1541 = scalar_lea.vmem [#allocation2], 56
      %v1542 = vld [vmem:[%s1541] sm:$0xff]
      %v1543 = vmul.f32 %v1542, 0.125
      %s1544 = scalar_lea.vmem [#allocation2], 120
      %v1545 = vld [vmem:[%s1544] sm:$0xff]
      %s1546 = scalar_lea.vmem [#allocation2], 184
      %v1547 = vld [vmem:[%s1546] sm:$0xff]
      %v1549 = vrot.slane %v1545, 1
      %v1550 = vrot.slane %v1545, 2
      %v1551 = vrot.slane %v1545, 3
      %v1552 = vrot.slane %v1545, 4
      %v1553 = vrot.slane %v1545, 5
      %v1554 = vrot.slane %v1545, 6
      %v1555 = vrot.slane %v1545, 7
      %v1556 = vperm.slane %v1545, 0
      %v1557 = vperm.slane %v1549, 0
      %v1558 = vperm.slane %v1550, 0
      %v1559 = vperm.slane %v1551, 0
      %v1560 = vperm.slane %v1552, 0
      %v1561 = vperm.slane %v1553, 0
      %v1562 = vperm.slane %v1554, 0
      %v1563 = vperm.slane %v1555, 0
      %v1572 = vmul.f32 %v1556, %v1543
      %v1573 = vmul.f32 %v1557, %v1543
      %v1574 = vmul.f32 %v1558, %v1543
      %v1575 = vmul.f32 %v1559, %v1543
      %v1576 = vmul.f32 %v1560, %v1543
      %v1577 = vmul.f32 %v1561, %v1543
      %v1578 = vmul.f32 %v1562, %v1543
      %v1579 = vmul.f32 %v1563, %v1543
      %v1580 = vmax.f32 %v1572, %v1576
      %v1581 = vmax.f32 %v1573, %v1577
      %v1582 = vmax.f32 %v1574, %v1578
      %v1583 = vmax.f32 %v1575, %v1579
      %v1584 = vmax.f32 %v1580, %v1581
      %v1585 = vmax.f32 %v1582, %v1583
      %v1586 = vmax.f32 %v1584, %v1585
      %v1587 = vsub.f32 %v1572, %v1586
      %v1588 = vsub.f32 %v1573, %v1586
      %v1589 = vsub.f32 %v1574, %v1586
      %v1590 = vsub.f32 %v1575, %v1586
      %v1591 = vsub.f32 %v1576, %v1586
      %v1592 = vsub.f32 %v1577, %v1586
      %v1593 = vsub.f32 %v1578, %v1586
      %v1594 = vsub.f32 %v1579, %v1586
      %v1595 = vmul.f32 %v1587, 1.442695
      %v1596 = vpow.pop %v1595
      %v1597 = vmul.f32 %v1588, 1.442695
      %v1598 = vpow.pop %v1597
      %v1599 = vmul.f32 %v1589, 1.442695
      %v1600 = vpow.pop %v1599
      %v1601 = vmul.f32 %v1590, 1.442695
      %v1602 = vpow.pop %v1601
      %v1603 = vmul.f32 %v1591, 1.442695
      %v1604 = vpow.pop %v1603
      %v1605 = vmul.f32 %v1592, 1.442695
      %v1606 = vpow.pop %v1605
      %v1607 = vmul.f32 %v1593, 1.442695
      %v1608 = vpow.pop %v1607
      %v1609 = vmul.f32 %v1594, 1.442695
      %v1610 = vpow.pop %v1609
      %v1611 = vadd.f32 %v1596, %v1598
      %v1612 = vadd.f32 %v1611, %v1600
      %v1613 = vadd.f32 %v1612, %v1602
      %v1614 = vadd.f32 %v1613, %v1604
      %v1615 = vadd.f32 %v1614, %v1606
      %v1616 = vadd.f32 %v1615, %v1608
      %v1617 = vadd.f32 %v1616, %v1610
      %v1619 = vrot.slane %v1547, 1
      %v1620 = vrot.slane %v1547, 2
      %v1621 = vrot.slane %v1547, 3
      %v1622 = vrot.slane %v1547, 4
      %v1623 = vrot.slane %v1547, 5
      %v1624 = vrot.slane %v1547, 6
      %v1625 = vrot.slane %v1547, 7
      %v1626 = vperm.slane %v1547, 0
      %v1627 = vperm.slane %v1619, 0
      %v1628 = vperm.slane %v1620, 0
      %v1629 = vperm.slane %v1621, 0
      %v1630 = vperm.slane %v1622, 0
      %v1631 = vperm.slane %v1623, 0
      %v1632 = vperm.slane %v1624, 0
      %v1633 = vperm.slane %v1625, 0
      %v1642 = vmul.f32 %v1596, %v1626
      %v1643 = vmul.f32 %v1598, %v1627
      %v1644 = vmul.f32 %v1600, %v1628
      %v1645 = vmul.f32 %v1602, %v1629
      %v1646 = vmul.f32 %v1604, %v1630
      %v1647 = vmul.f32 %v1606, %v1631
      %v1648 = vmul.f32 %v1608, %v1632
      %v1649 = vmul.f32 %v1610, %v1633
      %v1650 = vadd.f32 %v1642, %v1643
      %v1651 = vadd.f32 %v1650, %v1644
      %v1652 = vadd.f32 %v1651, %v1645
      %v1653 = vadd.f32 %v1652, %v1646
      %v1654 = vadd.f32 %v1653, %v1647
      %v1655 = vadd.f32 %v1654, %v1648
      %v1656 = vadd.f32 %v1655, %v1649
      %v1657 = vrcp.pop %v1617
      %v1658 = vmul.f32 %v1617, %v1657
      %v1659 = vsub.f32 2.0, %v1658
      %v1660 = vmul.f32 %v1657, %v1659
      %v1661 = vmul.f32 %v1656, %v1660
      %s1662 = scalar_lea.vmem [#allocation3], 56
      %1663 = vst [vmem:[%s1662] sm:$0xff] %v1661
      %v1664 = vld [vmem:[#allocation3] sm:$0xff]
      %v1665 = vld [vmem:[#allocation3 + $0x8] sm:$0xff]
      %v1666 = vld [vmem:[#allocation3 + $0x10] sm:$0xff]
      %v1667 = vld [vmem:[#allocation3 + $0x18] sm:$0xff]
      %v1668 = vld [vmem:[#allocation3 + $0x20] sm:$0xff]
      %v1669 = vld [vmem:[#allocation3 + $0x28] sm:$0xff]
      %v1670 = vld [vmem:[#allocation3 + $0x30] sm:$0xff]
      %v1671 = vld [vmem:[#allocation3 + $0x38] sm:$0xff]
      %v1672 = vld [vmem:[%s3] sm:$0xff]
      %v1673 = vld [vmem:[%s3 + $0x8] sm:$0xff]
      %v1674 = vld [vmem:[%s3 + $0x10] sm:$0xff]
      %v1675 = vld [vmem:[%s3 + $0x18] sm:$0xff]
      %v1676 = vld [vmem:[%s3 + $0x20] sm:$0xff]
      %v1677 = vld [vmem:[%s3 + $0x28] sm:$0xff]
      %v1678 = vld [vmem:[%s3 + $0x30] sm:$0xff]
      %v1679 = vld [vmem:[%s3 + $0x38] sm:$0xff]
      %v1680 = vld [vmem:[%s4] sm:$0x1]
      %v1682 = vperm.slane %v1680, 0
      %1684 = vxpose.xlu0.b32.start [1/16] %v1664, 128
      %1685 = vxpose.xlu0.b32.cont [2/16] %v1665, 128
      %1686 = vxpose.xlu0.b32.cont [3/16] %v1666, 128
      %1687 = vxpose.xlu0.b32.cont [4/16] %v1667, 128
      %1688 = vxpose.xlu0.b32.cont [5/16] %v1668, 128
      %1689 = vxpose.xlu0.b32.cont [6/16] %v1669, 128
      %1690 = vxpose.xlu0.b32.cont [7/16] %v1670, 128
      %1691 = vxpose.xlu0.b32.cont [8/16] %v1671, 128
      %1692 = vxpose.xlu0.b32.cont [9/16] 0.0, 128
      %1693 = vxpose.xlu0.b32.cont [10/16] 0.0, 128
      %1694 = vxpose.xlu0.b32.cont [11/16] 0.0, 128
      %1695 = vxpose.xlu0.b32.cont [12/16] 0.0, 128
      %1696 = vxpose.xlu0.b32.cont [13/16] 0.0, 128
      %1697 = vxpose.xlu0.b32.cont [14/16] 0.0, 128
      %1698 = vxpose.xlu0.b32.cont [15/16] 0.0, 128
      %1699 = vxpose.xlu0.b32.end [16/16] 0.0, 128
      %v1700 = vpop.trf.xlu0
      %v1701 = vpop.trf.xlu0
      %v1702 = vpop.trf.xlu0
      %v1703 = vpop.trf.xlu0
      %v1704 = vpop.trf.xlu0
      %v1705 = vpop.trf.xlu0
      %v1706 = vpop.trf.xlu0
      %v1707 = vpop.trf.xlu0
      %v1708 = vpop.trf.xlu0
      %v1709 = vpop.trf.xlu0
      %v1710 = vpop.trf.xlu0
      %v1711 = vpop.trf.xlu0
      %v1712 = vpop.trf.xlu0
      %v1713 = vpop.trf.xlu0
      %v1714 = vpop.trf.xlu0
      %v1715 = vpop.trf.xlu0
      %v1717 = vsel %vm448, %v1700, 0
      %v1720 = vsel %vm448, %v1701, 0
      %v1723 = vsel %vm448, %v1702, 0
      %v1726 = vsel %vm448, %v1703, 0
      %v1729 = vsel %vm448, %v1704, 0
      %v1732 = vsel %vm448, %v1705, 0
      %v1735 = vsel %vm448, %v1706, 0
      %v1738 = vsel %vm448, %v1707, 0
      %v1741 = vsel %vm448, %v1708, 0
      %v1744 = vsel %vm448, %v1709, 0
      %v1747 = vsel %vm448, %v1710, 0
      %v1750 = vsel %vm448, %v1711, 0
      %v1753 = vsel %vm448, %v1712, 0
      %v1756 = vsel %vm448, %v1713, 0
      %v1759 = vsel %vm448, %v1714, 0
      %v1762 = vsel %vm448, %v1715, 0
      %1764 = vmatpush.msra.mxu0 0.0
      %1765 = vmatpush.msra.mxu0 0.0
      %1766 = vmatpush.msra.mxu0 0.0
      %1767 = vmatpush.msra.mxu0 0.0
      %1768 = vmatpush.msra.mxu0 0.0
      %1769 = vmatpush.msra.mxu0 0.0
      %1770 = vmatpush.msra.mxu0 0.0
      %1771 = vmatpush.msra.mxu0 0.0
      %1772 = vmatpush.msra.mxu0 %v1679
      %1773 = vmatpush.msra.mxu0 %v1678
      %1774 = vmatpush.msra.mxu0 %v1677
      %1775 = vmatpush.msra.mxu0 %v1676
      %1776 = vmatpush.msra.mxu0 %v1675
      %1777 = vmatpush.msra.mxu0 %v1674
      %1778 = vmatpush.msra.mxu0 %v1673
      %1779 = vmatpush.msra.mxu0 %v1672
      %1780 = vmatmul.f32.gmra.mxu0 %v1717
      %v1781 = vpop.f32.mrf.mxu0
      %v1782 = vadd.f32 %v1682, %v1781
      %1783 = vmatmul.f32.gmra.mxu0 %v1720
      %v1784 = vpop.f32.mrf.mxu0
      %v1785 = vadd.f32 %v1682, %v1784
      %1786 = vmatmul.f32.gmra.mxu0 %v1723
      %v1787 = vpop.f32.mrf.mxu0
      %v1788 = vadd.f32 %v1682, %v1787
      %1789 = vmatmul.f32.gmra.mxu0 %v1726
      %v1790 = vpop.f32.mrf.mxu0
      %v1791 = vadd.f32 %v1682, %v1790
      %1792 = vmatmul.f32.gmra.mxu0 %v1729
      %v1793 = vpop.f32.mrf.mxu0
      %v1794 = vadd.f32 %v1682, %v1793
      %1795 = vmatmul.f32.gmra.mxu0 %v1732
      %v1796 = vpop.f32.mrf.mxu0
      %v1797 = vadd.f32 %v1682, %v1796
      %1798 = vmatmul.f32.gmra.mxu0 %v1735
      %v1799 = vpop.f32.mrf.mxu0
      %v1800 = vadd.f32 %v1682, %v1799
      %1801 = vmatmul.f32.gmra.mxu0 %v1738
      %v1802 = vpop.f32.mrf.mxu0
      %v1803 = vadd.f32 %v1682, %v1802
      %1804 = vmatmul.f32.gmra.mxu0 %v1741
      %v1805 = vpop.f32.mrf.mxu0
      %v1806 = vadd.f32 %v1682, %v1805
      %1807 = vmatmul.f32.gmra.mxu0 %v1744
      %v1808 = vpop.f32.mrf.mxu0
      %v1809 = vadd.f32 %v1682, %v1808
      %1810 = vmatmul.f32.gmra.mxu0 %v1747
      %v1811 = vpop.f32.mrf.mxu0
      %v1812 = vadd.f32 %v1682, %v1811
      %1813 = vmatmul.f32.gmra.mxu0 %v1750
      %v1814 = vpop.f32.mrf.mxu0
      %v1815 = vadd.f32 %v1682, %v1814
      %1816 = vmatmul.f32.gmra.mxu0 %v1753
      %v1817 = vpop.f32.mrf.mxu0
      %v1818 = vadd.f32 %v1682, %v1817
      %1819 = vmatmul.f32.gmra.mxu0 %v1756
      %v1820 = vpop.f32.mrf.mxu0
      %v1821 = vadd.f32 %v1682, %v1820
      %1822 = vmatmul.f32.gmra.mxu0 %v1759
      %v1823 = vpop.f32.mrf.mxu0
      %v1824 = vadd.f32 %v1682, %v1823
      %1825 = vmatmul.f32.gmra.mxu0 %v1762
      %v1826 = vpop.f32.mrf.mxu0
      %v1827 = vadd.f32 %v1682, %v1826
      %1828 = vdwg.mxu0
      %1829 = vst.msk [vmem:[%s262] sm:$0xff] %vm448, %v1782
      %1830 = vst.msk [vmem:[%s262 + $0x8] sm:$0xff] %vm448, %v1785
      %1831 = vst.msk [vmem:[%s262 + $0x10] sm:$0xff] %vm448, %v1788
      %1832 = vst.msk [vmem:[%s262 + $0x18] sm:$0xff] %vm448, %v1791
      %1833 = vst.msk [vmem:[%s262 + $0x20] sm:$0xff] %vm448, %v1794
      %1834 = vst.msk [vmem:[%s262 + $0x28] sm:$0xff] %vm448, %v1797
      %1835 = vst.msk [vmem:[%s262 + $0x30] sm:$0xff] %vm448, %v1800
      %1836 = vst.msk [vmem:[%s262 + $0x38] sm:$0xff] %vm448, %v1803
      %1837 = vst.msk [vmem:[%s262 + $0x40] sm:$0xff] %vm448, %v1806
      %1838 = vst.msk [vmem:[%s262 + $0x48] sm:$0xff] %vm448, %v1809
      %1839 = vst.msk [vmem:[%s262 + $0x50] sm:$0xff] %vm448, %v1812
      %1840 = vst.msk [vmem:[%s262 + $0x58] sm:$0xff] %vm448, %v1815
      %1841 = vst.msk [vmem:[%s262 + $0x60] sm:$0xff] %vm448, %v1818
      %1842 = vst.msk [vmem:[%s262 + $0x68] sm:$0xff] %vm448, %v1821
      %1843 = vst.msk [vmem:[%s262 + $0x70] sm:$0xff] %vm448, %v1824
      %1844 = vst.msk [vmem:[%s262 + $0x78] sm:$0xff] %vm448, %v1827
      %s1845 = smul.u32 16, %s21
      %p1846 = scmp.lt.s32.totalorder %s20, 1
      %s1847 = scalar_select %p1846, %s20, 1
      %p1848 = scmp.lt.s32.totalorder %s1845, 31
      %s1849 = scalar_select %p1848, %s1845, 31
      %s1850 = smul.addr %s1847, 32
      %s1851 = sadd.s32 %s1849, %s1850
      %s1852 = smul.addr %s1851, 8
      %s1853 = scalar_lea.vmem %s5, %s1852
      // Predicated region
      $region41: #{tpu_custom_call.1} parent=39 // pred_check
        %p1854 = pneg %p160
      $region42: #{tpu_custom_call.1} parent=39 // pred_check_branch
        %1856 = sbr.rel (%p1854) target = $region44
      $region43: #{tpu_custom_call.1} parent=39 // pred_region
        %s1857 = smul.u32 16, %s21
      $region44: #{tpu_custom_call.1} parent=39 // pred_fallthru
        _
    $region40: #{tpu_custom_call.1} parent=5 // pred_fallthru
      _
    %p1858 = scmp.le.s32.totalorder 2, %s11
    // Predicated region
    $region45: #{tpu_custom_call.1} parent=5 // pred_check
      %p1859 = pneg %p1858
    $region46: #{tpu_custom_call.1} parent=5 // pred_check_branch
      %1861 = sbr.rel (%p1859) target = $region48
    $region47: #{tpu_custom_call.1} parent=5 // pred_region
      %s1862 = ssub.s32 %s11, 2
      // Predicated region
      $region49: #{tpu_custom_call.1} parent=47 // pred_check
        %p1863 = pneg %p166
      $region50: #{tpu_custom_call.1} parent=47 // pred_check_branch
        %1865 = sbr.rel (%p1863) target = $region52
      $region51: #{tpu_custom_call.1} parent=47 // pred_region
        %s1866 = smul.u32 16, %s23
        %p1867 = scmp.lt.s32.totalorder %s22, 1
        %s1868 = scalar_select %p1867, %s22, 1
        %p1869 = scmp.lt.s32.totalorder %s1866, 31
        %s1870 = scalar_select %p1869, %s1866, 31
        %s1871 = smul.addr %s1868, 32
        %s1872 = sadd.s32 %s1870, %s1871
        %s1873 = smul.addr %s1872, 8
        %s1874 = scalar_lea.vmem %s5, %s1873
      $region52: #{tpu_custom_call.1} parent=47 // pred_fallthru
        _
    $region48: #{tpu_custom_call.1} parent=5 // pred_fallthru
      _
  $region6: #{tpu_custom_call.1} parent=0 // loop_footer
    %s15 = sadd.s32 1, %s11
  $region7: #{tpu_custom_call.1} parent=0 // loop_footer_branch
    %10 = sbr.rel target = $region3
  $region8: #{tpu_custom_call.1} parent=0 // loop_exit
    _

</llo_original>
